<compile_context>
chip_gen: v7x
topology: tpu7x:2x2x1
jax: 0.10.0
libtpu: 0.0.40
codegen_flags: <defaults>
</compile_context>

<pallas_src>
import functools

import jax
import jax.numpy as jnp
from jax.experimental import pallas as pl
from jax.experimental.pallas import tpu as pltpu

IN_DIM = 28 * 28     # 784
H1 = 512
H2 = 128
OUT_DIM = 10
OUT_PAD = 128        # lane-dense padded output width (unmasked vst)


def _round_up(a, m):
    return (a + m - 1) // m * m


def mlp_kernel(x_ref, w1_ref, b1_ref, w23_ref, b23_ref, o_ref):
    # Two chained MXU matmuls with f32 accumulation.  Compute dtype follows the
    # weights (f32, or bf16 when use_bf16=True); bias adds stay in f32 on the
    # VPU (safe on v5e, which has no bf16 VPU path).
    cdt = w1_ref.dtype
    x = x_ref[...].astype(cdt)
    h1 = jnp.dot(x, w1_ref[...], preferred_element_type=jnp.float32) + b1_ref[...]
    out = (jnp.dot(h1.astype(cdt), w23_ref[...],
                   preferred_element_type=jnp.float32) + b23_ref[...])
    o_ref[...] = out.astype(o_ref.dtype)


@functools.partial(jax.jit, static_argnames=("batch_tile", "use_bf16"))
def no_act_net_forward(x, params, batch_tile=512, use_bf16=False):
    """x: (B, 784). params: dict of w1,b1,w2,b2,w3,b3 in (in, out) layout."""
    B = x.shape[0]
    assert x.shape[1] == IN_DIM
    batch_tile = max(8, _round_up(batch_tile, 8))

    # ---- tile / grid choice (all static, shape-driven Python ints) --------
    if B <= batch_tile:
        # One block spanning the whole (possibly unaligned) batch dim: a block
        # dim equal to the full array dim is always legal.
        tile = B
        if B >= 2 * 256:
            # v7x has 2 TensorCores: make grid >= 2 whenever each half still
            # fills the 256-row MXU, so "parallel" actually shards the work.
            tile = _round_up(pl.cdiv(B, 2), 8)
    else:
        tile = batch_tile
    grid = (pl.cdiv(B, tile),)

    # ---- parameter prep (tiny, runs outside the kernel) -------------------
    cdt = jnp.bfloat16 if use_bf16 else jnp.float32
    x = x.astype(jnp.float32)
    w1 = params["w1"].astype(cdt)
    b1 = params["b1"].astype(jnp.float32)
    # Fold fc2/fc3: pad fc3's output 10 -> 128 lanes, then collapse W2@W3.
    w3p = jnp.zeros((H2, OUT_PAD), jnp.float32).at[:, :OUT_DIM].set(params["w3"])
    b3p = jnp.zeros((1, OUT_PAD), jnp.float32).at[:, :OUT_DIM].set(params["b3"])
    w23 = (params["w2"] @ w3p).astype(cdt)
    b23 = (params["b2"] @ w3p + b3p).astype(jnp.float32)

    full = lambda shape: pl.BlockSpec(shape, lambda i: (0, 0))  # resident params

    out = pl.pallas_call(
        mlp_kernel,
        out_shape=jax.ShapeDtypeStruct((B, OUT_PAD), jnp.float32),
        grid_spec=pltpu.PrefetchScalarGridSpec(
            num_scalar_prefetch=0,
            grid=grid,
            in_specs=[
                pl.BlockSpec((tile, IN_DIM), lambda i: (i, 0)),  # x tile, no pad
                full((IN_DIM, H1)),      # w1
                full((1, H1)),           # b1
                full((H1, OUT_PAD)),     # w23 = fc2 @ fc3 (lane-dense)
                full((1, OUT_PAD)),      # b23
            ],
            out_specs=pl.BlockSpec((tile, OUT_PAD), lambda i: (i, 0)),
        ),
        compiler_params=pltpu.CompilerParams(
            dimension_semantics=("parallel",),
        ),
    )(x, w1, b1, w23, b23)

    # Only lane padding to strip; no padded batch rows were ever written.
    return out[:, :OUT_DIM]


def init_params(key):
    """Deterministic init mirroring nn.Linear defaults (U(-1/sqrt(fan_in), +))."""
    def linear(key, fan_in, fan_out):
        kw, kb = jax.random.split(key)
        bound = 1.0 / jnp.sqrt(fan_in)
        # stored as (in, out) so the kernel computes x @ W
        w = jax.random.uniform(kw, (fan_in, fan_out), jnp.float32, -bound, bound)
        b = jax.random.uniform(kb, (1, fan_out), jnp.float32, -bound, bound)
        return w, b

    k1, k2, k3 = jax.random.split(key, 3)
    w1, b1 = linear(k1, IN_DIM, H1)
    w2, b2 = linear(k2, H1, H2)
    w3, b3 = linear(k3, H2, OUT_DIM)
    return {"w1": w1, "b1": b1, "w2": w2, "b2": b2, "w3": w3, "b3": b3}


def reference_forward(x, p):
    h1 = x @ p["w1"] + p["b1"]
    h2 = h1 @ p["w2"] + p["b2"]
    return h2 @ p["w3"] + p["b3"]


if __name__ == "__main__":
    key = jax.random.PRNGKey(0)
    kx, kp = jax.random.split(key)
    params = init_params(kp)

    # Small, non-8-aligned batch: single full-array block, grid = 1.
    B1 = 4
    x1 = jax.random.normal(kx, (B1, IN_DIM), dtype=jnp.float32)
    out1 = jax.block_until_ready(no_act_net_forward(x1, params))
    ref1 = reference_forward(x1, params)
    assert out1.shape == (B1, OUT_DIM)
    assert jnp.allclose(out1, ref1, atol=1e-3, rtol=1e-3), "mismatch (B=4)"

    # Multi-tile batch with a ragged last block: exercises the masked partial
    # store and the >=2-step grid that feeds both v7x TensorCores.
    B2 = 640
    x2 = jax.random.normal(jax.random.fold_in(kx, 1), (B2, IN_DIM),
                           dtype=jnp.float32)
    out2 = jax.block_until_ready(no_act_net_forward(x2, params))
    ref2 = reference_forward(x2, params)
    assert out2.shape == (B2, OUT_DIM)
    assert jnp.allclose(out2, ref2, atol=1e-3, rtol=1e-3), "mismatch (B=640)"

    # Opt-in bf16 MXU path (f32 accumulation); looser tolerance by design.
    out3 = jax.block_until_ready(
        no_act_net_forward(x2, params, use_bf16=True))
    assert out3.shape == (B2, OUT_DIM)
    assert jnp.allclose(out3, ref2, atol=5e-2, rtol=5e-2), "mismatch (bf16)"

    print("KERNEL_OK")
</pallas_src>

<mosaic_0001>
module attributes {stable_mosaic.version = 11 : i64} {
  func.func @mlp_kernel(%arg0: i32, %arg1: memref<4x784xf32, #tpu.memory_space<vmem>>, %arg2: memref<784x512xf32, #tpu.memory_space<vmem>>, %arg3: memref<1x512xf32, #tpu.memory_space<vmem>>, %arg4: memref<512x128xf32, #tpu.memory_space<vmem>>, %arg5: memref<1x128xf32, #tpu.memory_space<vmem>>, %arg6: memref<4x128xf32, #tpu.memory_space<vmem>>) attributes {dimension_semantics = [#tpu.dimension_semantics<parallel>], iteration_bounds = array<i64: 1>, scalar_prefetch = 0 : i64, scratch_operands = 0 : i64, tpu.core_type = #tpu.core_type<tc>, window_params = [{transform_indices = @transform_0, window_bounds = array<i64: 4, 784>}, {pipeline_mode = #tpu.pipeline_mode<synchronous>, transform_indices = @transform_1, window_bounds = array<i64: 784, 512>}, {pipeline_mode = #tpu.pipeline_mode<synchronous>, transform_indices = @transform_2, window_bounds = array<i64: 1, 512>}, {pipeline_mode = #tpu.pipeline_mode<synchronous>, transform_indices = @transform_3, window_bounds = array<i64: 512, 128>}, {pipeline_mode = #tpu.pipeline_mode<synchronous>, transform_indices = @transform_4, window_bounds = array<i64: 1, 128>}, {transform_indices = @transform_5, window_bounds = array<i64: 4, 128>}]} {
    %c0 = arith.constant 0 : index
    %c0_0 = arith.constant 0 : index
    %0 = vector.load %arg1[%c0, %c0_0] : memref<4x784xf32, #tpu.memory_space<vmem>>, vector<4x784xf32>
    %c0_1 = arith.constant 0 : index
    %c0_2 = arith.constant 0 : index
    %1 = vector.load %arg2[%c0_1, %c0_2] : memref<784x512xf32, #tpu.memory_space<vmem>>, vector<784x512xf32>
    %cst = arith.constant dense<0.000000e+00> : vector<4x512xf32>
    %2 = tpu.matmul %0, %1, %cst {dimension_numbers = #tpu.dot_dimension_numbers<[1], [0], [0], [1], [0, 0, 1, 1], [], []>} : vector<4x784xf32>, vector<784x512xf32>, vector<4x512xf32> -> vector<4x512xf32>
    %c0_3 = arith.constant 0 : index
    %c0_4 = arith.constant 0 : index
    %3 = vector.load %arg3[%c0_3, %c0_4] : memref<1x512xf32, #tpu.memory_space<vmem>>, vector<1x512xf32>
    %4 = vector.broadcast %3 : vector<1x512xf32> to vector<4x512xf32>
    %5 = arith.addf %2, %4 : vector<4x512xf32>
    %c0_5 = arith.constant 0 : index
    %c0_6 = arith.constant 0 : index
    %6 = vector.load %arg4[%c0_5, %c0_6] : memref<512x128xf32, #tpu.memory_space<vmem>>, vector<512x128xf32>
    %cst_7 = arith.constant dense<0.000000e+00> : vector<4x128xf32>
    %7 = tpu.matmul %5, %6, %cst_7 {dimension_numbers = #tpu.dot_dimension_numbers<[1], [0], [0], [1], [0, 0, 1, 1], [], []>} : vector<4x512xf32>, vector<512x128xf32>, vector<4x128xf32> -> vector<4x128xf32>
    %c0_8 = arith.constant 0 : index
    %c0_9 = arith.constant 0 : index
    %8 = vector.load %arg5[%c0_8, %c0_9] : memref<1x128xf32, #tpu.memory_space<vmem>>, vector<1x128xf32>
    %9 = vector.broadcast %8 : vector<1x128xf32> to vector<4x128xf32>
    %10 = arith.addf %7, %9 : vector<4x128xf32>
    %c0_10 = arith.constant 0 : index
    %c0_11 = arith.constant 0 : index
    %11 = vector.load %arg6[%c0_10, %c0_11] : memref<4x128xf32, #tpu.memory_space<vmem>>, vector<4x128xf32>
    tpu.vector_store %arg6[%c0_10, %c0_11], %10 {strides = array<i32>} : memref<4x128xf32, #tpu.memory_space<vmem>>, vector<4x128xf32>,
    return
  }
  func.func @transform_0(%arg0: i32) -> (i32, i32) {
    %c0_i32 = arith.constant 0 : i32
    %c0_i32_0 = arith.constant 0 : i32
    return %arg0, %c0_i32 : i32, i32
  }
  func.func @transform_1(%arg0: i32) -> (i32, i32) {
    %c0_i32 = arith.constant 0 : i32
    %c0_i32_0 = arith.constant 0 : i32
    %c0_i32_1 = arith.constant 0 : i32
    return %c0_i32, %c0_i32_0 : i32, i32
  }
  func.func @transform_2(%arg0: i32) -> (i32, i32) {
    %c0_i32 = arith.constant 0 : i32
    %c0_i32_0 = arith.constant 0 : i32
    %c0_i32_1 = arith.constant 0 : i32
    return %c0_i32, %c0_i32_0 : i32, i32
  }
  func.func @transform_3(%arg0: i32) -> (i32, i32) {
    %c0_i32 = arith.constant 0 : i32
    %c0_i32_0 = arith.constant 0 : i32
    %c0_i32_1 = arith.constant 0 : i32
    return %c0_i32, %c0_i32_0 : i32, i32
  }
  func.func @transform_4(%arg0: i32) -> (i32, i32) {
    %c0_i32 = arith.constant 0 : i32
    %c0_i32_0 = arith.constant 0 : i32
    %c0_i32_1 = arith.constant 0 : i32
    return %c0_i32, %c0_i32_0 : i32, i32
  }
  func.func @transform_5(%arg0: i32) -> (i32, i32) {
    %c0_i32 = arith.constant 0 : i32
    %c0_i32_0 = arith.constant 0 : i32
    return %arg0, %c0_i32 : i32, i32
  }
}

</mosaic_0001>

<llo_original>
// kernel: no_act_net_forward.1
$region0: #{no_act_net_forward.1}
  #allocation0 [shape = 'u32[]', space=smem, size = 0x4, offset = 0x4, fixed_abs, tag = 'smem constant byte address 0x4 - core index']
  #allocation1 [shape = 'u32[144,128]{1,0:T(1,128)}', space=vmem, size = 0x12000, scoped, tag = 'internal scratch']
  %s0 = inlined_call_operand.hbm [shape: f32[4,784], index: 0, kind: input, shape index: {}]
  %s1 = inlined_call_operand.hbm [shape: f32[784,512], index: 1, kind: input, shape index: {}]
  %s2 = inlined_call_operand.hbm [shape: f32[1,512], index: 2, kind: input, shape index: {}]
  %s3 = inlined_call_operand.vmem [shape: f32[512,128], index: 3, kind: input, shape index: {}]
  %s4 = inlined_call_operand.vmem [shape: f32[1,128], index: 4, kind: input, shape index: {}]
  %s5 = inlined_call_operand.hbm [shape: f32[4,128], index: 5, kind: output, shape index: {}]
  %s6 = sld [smem:[#allocation0]]
  $region42: #{no_act_net_forward.1} parent=0
    _
  %s8 = ssub.s32 1, %s6
  %s9 = scalar_select 0, %s8, %s6
  $region1: #{no_act_net_forward.1} parent=0
    #allocation2 [shape = 'u8[14336]{0}', space=vmem, size = 0x3800, scoped, tag = 'input window, operand 0, single buffered']
    #allocation3 [shape = 's32[1]{0}', space=sflag, size = 0x4, scoped, tag = 'scoped memory for no_act_net_forward.1']
    #allocation4 [shape = 's32[1]{0}', space=sflag, size = 0x4, scoped, tag = 'scoped memory for no_act_net_forward.1']
    #allocation5 [shape = 'u8[1605632]{0}', space=vmem, size = 0x188000, scoped, tag = 'input window, operand 1, single buffered']
    #allocation6 [shape = 's32[1]{0}', space=sflag, size = 0x4, scoped, tag = 'scoped memory for no_act_net_forward.1']
    #allocation7 [shape = 'u8[2048]{0}', space=vmem, size = 0x800, scoped, tag = 'input window, operand 2, single buffered']
    #allocation8 [shape = 'u8[2048]{0}', space=vmem, size = 0x800, scoped, tag = 'output window, operand 0, single buffered']
    %10 = vsyncpa [#allocation3], 0
    %11 = vsyncpa [#allocation6], 0
    %12 = vsyncpa [#allocation4], 0
    // Predicated region
    $region2: #{no_act_net_forward.1} parent=1 // pred_check
      _
    $region3: #{no_act_net_forward.1} parent=1 // pred_check_branch
      %14 = sbr.rel (0) target = $region5
    $region4: #{no_act_net_forward.1} parent=1 // pred_region
      %s16 = ssub.s32 448, 448
      %17 = vsyncadd [#allocation3], %s16
      %s19 = sshll.u32 [#allocation2], 4
      %s20 = int_to_ptr.vmem [resolvable:$true] %s19
      %22 = dma.hbm_to_vmem [thread:$0]  %s0, 448, %s20, [#allocation3]
    $region5: #{no_act_net_forward.1} parent=1 // pred_fallthru
      _
    // Predicated region
    $region6: #{no_act_net_forward.1} parent=1 // pred_check
      _
    $region7: #{no_act_net_forward.1} parent=1 // pred_check_branch
      %24 = sbr.rel (0) target = $region9
    $region8: #{no_act_net_forward.1} parent=1 // pred_region
      %s26 = ssub.s32 50176, 50176
      %27 = vsyncadd [#allocation6], %s26
      %s28 = sshll.u32 [#allocation5], 4
      %s29 = int_to_ptr.vmem [resolvable:$true] %s28
      %34 = dma.hbm_to_vmem [thread:$0]  %s1, 50176, %s29, [#allocation6], 512, 512, 32
    $region9: #{no_act_net_forward.1} parent=1 // pred_fallthru
      _
    // Predicated region
    $region10: #{no_act_net_forward.1} parent=1 // pred_check
      _
    $region11: #{no_act_net_forward.1} parent=1 // pred_check_branch
      %36 = sbr.rel (0) target = $region13
    $region12: #{no_act_net_forward.1} parent=1 // pred_region
      %s38 = ssub.s32 64, 64
      %39 = vsyncadd [#allocation6], %s38
      %s41 = sshll.u32 [#allocation7], 4
      %s42 = int_to_ptr.vmem [resolvable:$true] %s41
      %44 = dma.hbm_to_vmem [thread:$0]  %s2, 64, %s42, [#allocation6]
    $region13: #{no_act_net_forward.1} parent=1 // pred_fallthru
      _
    // Predicated region
    $region14: #{no_act_net_forward.1} parent=1 // pred_check
      _
    $region15: #{no_act_net_forward.1} parent=1 // pred_check_branch
      %46 = sbr.rel (0) target = $region17
    $region16: #{no_act_net_forward.1} parent=1 // pred_region
      _
    $region17: #{no_act_net_forward.1} parent=1 // pred_fallthru
      _
    // Predicated region
    $region18: #{no_act_net_forward.1} parent=1 // pred_check
      _
    $region19: #{no_act_net_forward.1} parent=1 // pred_check_branch
      %48 = sbr.rel (0) target = $region21
    $region20: #{no_act_net_forward.1} parent=1 // pred_region
      _
    $region21: #{no_act_net_forward.1} parent=1 // pred_fallthru
      _
    // Predicated region
    $region22: #{no_act_net_forward.1} parent=1 // pred_check
      _
    $region23: #{no_act_net_forward.1} parent=1 // pred_check_branch
      %50 = sbr.rel (0) target = $region25
    $region24: #{no_act_net_forward.1} parent=1 // pred_region
      %51 = dma.done [#allocation3], 448
    $region25: #{no_act_net_forward.1} parent=1 // pred_fallthru
      _
    // Predicated region
    $region26: #{no_act_net_forward.1} parent=1 // pred_check
      _
    $region27: #{no_act_net_forward.1} parent=1 // pred_check_branch
      %53 = sbr.rel (0) target = $region29
    $region28: #{no_act_net_forward.1} parent=1 // pred_region
      %54 = dma.done [#allocation6], 50176
    $region29: #{no_act_net_forward.1} parent=1 // pred_fallthru
      _
    // Predicated region
    $region30: #{no_act_net_forward.1} parent=1 // pred_check
      _
    $region31: #{no_act_net_forward.1} parent=1 // pred_check_branch
      %56 = sbr.rel (0) target = $region33
    $region32: #{no_act_net_forward.1} parent=1 // pred_region
      %57 = dma.done [#allocation6], 64
    $region33: #{no_act_net_forward.1} parent=1 // pred_fallthru
      _
    %v58 = vld [vmem:[#allocation2] sm:$0xff]
    %v59 = vld [vmem:[#allocation2 + $0x8] sm:$0xff]
    %v60 = vld [vmem:[#allocation2 + $0x10] sm:$0xff]
    %v61 = vld [vmem:[#allocation2 + $0x18] sm:$0xf]
    %v62 = vld [vmem:[#allocation5] sm:$0xff]
    %v63 = vld [vmem:[#allocation5 + $0x8] sm:$0xff]
    %v64 = vld [vmem:[#allocation5 + $0x10] sm:$0xff]
    %v65 = vld [vmem:[#allocation5 + $0x18] sm:$0xff]
    %v66 = vld [vmem:[#allocation5 + $0x20] sm:$0xff]
    %v67 = vld [vmem:[#allocation5 + $0x28] sm:$0xff]
    %v68 = vld [vmem:[#allocation5 + $0x30] sm:$0xff]
    %v69 = vld [vmem:[#allocation5 + $0x38] sm:$0xff]
    %v70 = vld [vmem:[#allocation5 + $0x40] sm:$0xff]
    %v71 = vld [vmem:[#allocation5 + $0x48] sm:$0xff]
    %v72 = vld [vmem:[#allocation5 + $0x50] sm:$0xff]
    %v73 = vld [vmem:[#allocation5 + $0x58] sm:$0xff]
    %v74 = vld [vmem:[#allocation5 + $0x60] sm:$0xff]
    %v75 = vld [vmem:[#allocation5 + $0x68] sm:$0xff]
    %v76 = vld [vmem:[#allocation5 + $0x70] sm:$0xff]
    %v77 = vld [vmem:[#allocation5 + $0x78] sm:$0xff]
    %v78 = vld [vmem:[#allocation5 + $0x80] sm:$0xff]
    %v79 = vld [vmem:[#allocation5 + $0x88] sm:$0xff]
    %v80 = vld [vmem:[#allocation5 + $0x90] sm:$0xff]
    %v81 = vld [vmem:[#allocation5 + $0x98] sm:$0xff]
    %v82 = vld [vmem:[#allocation5 + $0xa0] sm:$0xff]
    %v83 = vld [vmem:[#allocation5 + $0xa8] sm:$0xff]
    %v84 = vld [vmem:[#allocation5 + $0xb0] sm:$0xff]
    %v85 = vld [vmem:[#allocation5 + $0xb8] sm:$0xff]
    %v86 = vld [vmem:[#allocation5 + $0xc0] sm:$0xff]
    %v87 = vld [vmem:[#allocation5 + $0xc8] sm:$0xff]
    %v88 = vld [vmem:[#allocation5 + $0xd0] sm:$0xff]
    %v89 = vld [vmem:[#allocation5 + $0xd8] sm:$0xff]
    %v90 = vld [vmem:[#allocation5 + $0xe0] sm:$0xff]
    %v91 = vld [vmem:[#allocation5 + $0xe8] sm:$0xff]
    %v92 = vld [vmem:[#allocation5 + $0xf0] sm:$0xff]
    %v93 = vld [vmem:[#allocation5 + $0xf8] sm:$0xff]
    %v94 = vld [vmem:[#allocation5 + $0x100] sm:$0xff]
    %v95 = vld [vmem:[#allocation5 + $0x108] sm:$0xff]
    %v96 = vld [vmem:[#allocation5 + $0x110] sm:$0xff]
    %v97 = vld [vmem:[#allocation5 + $0x118] sm:$0xff]
    %v98 = vld [vmem:[#allocation5 + $0x120] sm:$0xff]
    %v99 = vld [vmem:[#allocation5 + $0x128] sm:$0xff]
    %v100 = vld [vmem:[#allocation5 + $0x130] sm:$0xff]
    %v101 = vld [vmem:[#allocation5 + $0x138] sm:$0xff]
    %v102 = vld [vmem:[#allocation5 + $0x140] sm:$0xff]
    %v103 = vld [vmem:[#allocation5 + $0x148] sm:$0xff]
    %v104 = vld [vmem:[#allocation5 + $0x150] sm:$0xff]
    %v105 = vld [vmem:[#allocation5 + $0x158] sm:$0xff]
    %v106 = vld [vmem:[#allocation5 + $0x160] sm:$0xff]
    %v107 = vld [vmem:[#allocation5 + $0x168] sm:$0xff]
    %v108 = vld [vmem:[#allocation5 + $0x170] sm:$0xff]
    %v109 = vld [vmem:[#allocation5 + $0x178] sm:$0xff]
    %v110 = vld [vmem:[#allocation5 + $0x180] sm:$0xff]
    %v111 = vld [vmem:[#allocation5 + $0x188] sm:$0xff]
    %v112 = vld [vmem:[#allocation5 + $0x190] sm:$0xff]
    %v113 = vld [vmem:[#allocation5 + $0x198] sm:$0xff]
    %v114 = vld [vmem:[#allocation5 + $0x1a0] sm:$0xff]
    %v115 = vld [vmem:[#allocation5 + $0x1a8] sm:$0xff]
    %v116 = vld [vmem:[#allocation5 + $0x1b0] sm:$0xff]
    %v117 = vld [vmem:[#allocation5 + $0x1b8] sm:$0xff]
    %v118 = vld [vmem:[#allocation5 + $0x1c0] sm:$0xff]
    %v119 = vld [vmem:[#allocation5 + $0x1c8] sm:$0xff]
    %v120 = vld [vmem:[#allocation5 + $0x1d0] sm:$0xff]
    %v121 = vld [vmem:[#allocation5 + $0x1d8] sm:$0xff]
    %v122 = vld [vmem:[#allocation5 + $0x1e0] sm:$0xff]
    %v123 = vld [vmem:[#allocation5 + $0x1e8] sm:$0xff]
    %v124 = vld [vmem:[#allocation5 + $0x1f0] sm:$0xff]
    %v125 = vld [vmem:[#allocation5 + $0x1f8] sm:$0xff]
    %v126 = vld [vmem:[#allocation5 + $0x200] sm:$0xff]
    %v127 = vld [vmem:[#allocation5 + $0x208] sm:$0xff]
    %v128 = vld [vmem:[#allocation5 + $0x210] sm:$0xff]
    %v129 = vld [vmem:[#allocation5 + $0x218] sm:$0xff]
    %v130 = vld [vmem:[#allocation5 + $0x220] sm:$0xff]
    %v131 = vld [vmem:[#allocation5 + $0x228] sm:$0xff]
    %v132 = vld [vmem:[#allocation5 + $0x230] sm:$0xff]
    %v133 = vld [vmem:[#allocation5 + $0x238] sm:$0xff]
    %v134 = vld [vmem:[#allocation5 + $0x240] sm:$0xff]
    %v135 = vld [vmem:[#allocation5 + $0x248] sm:$0xff]
    %v136 = vld [vmem:[#allocation5 + $0x250] sm:$0xff]
    %v137 = vld [vmem:[#allocation5 + $0x258] sm:$0xff]
    %v138 = vld [vmem:[#allocation5 + $0x260] sm:$0xff]
    %v139 = vld [vmem:[#allocation5 + $0x268] sm:$0xff]
    %v140 = vld [vmem:[#allocation5 + $0x270] sm:$0xff]
    %v141 = vld [vmem:[#allocation5 + $0x278] sm:$0xff]
    %v142 = vld [vmem:[#allocation5 + $0x280] sm:$0xff]
    %v143 = vld [vmem:[#allocation5 + $0x288] sm:$0xff]
    %v144 = vld [vmem:[#allocation5 + $0x290] sm:$0xff]
    %v145 = vld [vmem:[#allocation5 + $0x298] sm:$0xff]
    %v146 = vld [vmem:[#allocation5 + $0x2a0] sm:$0xff]
    %v147 = vld [vmem:[#allocation5 + $0x2a8] sm:$0xff]
    %v148 = vld [vmem:[#allocation5 + $0x2b0] sm:$0xff]
    %v149 = vld [vmem:[#allocation5 + $0x2b8] sm:$0xff]
    %v150 = vld [vmem:[#allocation5 + $0x2c0] sm:$0xff]
    %v151 = vld [vmem:[#allocation5 + $0x2c8] sm:$0xff]
    %v152 = vld [vmem:[#allocation5 + $0x2d0] sm:$0xff]
    %v153 = vld [vmem:[#allocation5 + $0x2d8] sm:$0xff]
    %v154 = vld [vmem:[#allocation5 + $0x2e0] sm:$0xff]
    %v155 = vld [vmem:[#allocation5 + $0x2e8] sm:$0xff]
    %v156 = vld [vmem:[#allocation5 + $0x2f0] sm:$0xff]
    %v157 = vld [vmem:[#allocation5 + $0x2f8] sm:$0xff]
    %v158 = vld [vmem:[#allocation5 + $0x300] sm:$0xff]
    %v159 = vld [vmem:[#allocation5 + $0x308] sm:$0xff]
    %v160 = vld [vmem:[#allocation5 + $0x310] sm:$0xff]
    %v161 = vld [vmem:[#allocation5 + $0x318] sm:$0xff]
    %v162 = vld [vmem:[#allocation5 + $0x320] sm:$0xff]
    %v163 = vld [vmem:[#allocation5 + $0x328] sm:$0xff]
    %v164 = vld [vmem:[#allocation5 + $0x330] sm:$0xff]
    %v165 = vld [vmem:[#allocation5 + $0x338] sm:$0xff]
    %v166 = vld [vmem:[#allocation5 + $0x340] sm:$0xff]
    %v167 = vld [vmem:[#allocation5 + $0x348] sm:$0xff]
    %v168 = vld [vmem:[#allocation5 + $0x350] sm:$0xff]
    %v169 = vld [vmem:[#allocation5 + $0x358] sm:$0xff]
    %v170 = vld [vmem:[#allocation5 + $0x360] sm:$0xff]
    %v171 = vld [vmem:[#allocation5 + $0x368] sm:$0xff]
    %v172 = vld [vmem:[#allocation5 + $0x370] sm:$0xff]
    %v173 = vld [vmem:[#allocation5 + $0x378] sm:$0xff]
    %v174 = vld [vmem:[#allocation5 + $0x380] sm:$0xff]
    %v175 = vld [vmem:[#allocation5 + $0x388] sm:$0xff]
    %v176 = vld [vmem:[#allocation5 + $0x390] sm:$0xff]
    %v177 = vld [vmem:[#allocation5 + $0x398] sm:$0xff]
    %v178 = vld [vmem:[#allocation5 + $0x3a0] sm:$0xff]
    %v179 = vld [vmem:[#allocation5 + $0x3a8] sm:$0xff]
    %v180 = vld [vmem:[#allocation5 + $0x3b0] sm:$0xff]
    %v181 = vld [vmem:[#allocation5 + $0x3b8] sm:$0xff]
    %v182 = vld [vmem:[#allocation5 + $0x3c0] sm:$0xff]
    %v183 = vld [vmem:[#allocation5 + $0x3c8] sm:$0xff]
    %v184 = vld [vmem:[#allocation5 + $0x3d0] sm:$0xff]
    %v185 = vld [vmem:[#allocation5 + $0x3d8] sm:$0xff]
    %v186 = vld [vmem:[#allocation5 + $0x3e0] sm:$0xff]
    %v187 = vld [vmem:[#allocation5 + $0x3e8] sm:$0xff]
    %v188 = vld [vmem:[#allocation5 + $0x3f0] sm:$0xff]
    %v189 = vld [vmem:[#allocation5 + $0x3f8] sm:$0xff]
    %v190 = vld [vmem:[#allocation5 + $0x400] sm:$0xff]
    %v191 = vld [vmem:[#allocation5 + $0x408] sm:$0xff]
    %v192 = vld [vmem:[#allocation5 + $0x410] sm:$0xff]
    %v193 = vld [vmem:[#allocation5 + $0x418] sm:$0xff]
    %v194 = vld [vmem:[#allocation5 + $0x420] sm:$0xff]
    %v195 = vld [vmem:[#allocation5 + $0x428] sm:$0xff]
    %v196 = vld [vmem:[#allocation5 + $0x430] sm:$0xff]
    %v197 = vld [vmem:[#allocation5 + $0x438] sm:$0xff]
    %v198 = vld [vmem:[#allocation5 + $0x440] sm:$0xff]
    %v199 = vld [vmem:[#allocation5 + $0x448] sm:$0xff]
    %v200 = vld [vmem:[#allocation5 + $0x450] sm:$0xff]
    %v201 = vld [vmem:[#allocation5 + $0x458] sm:$0xff]
    %v202 = vld [vmem:[#allocation5 + $0x460] sm:$0xff]
    %v203 = vld [vmem:[#allocation5 + $0x468] sm:$0xff]
    %v204 = vld [vmem:[#allocation5 + $0x470] sm:$0xff]
    %v205 = vld [vmem:[#allocation5 + $0x478] sm:$0xff]
    %v206 = vld [vmem:[#allocation5 + $0x480] sm:$0xff]
    %v207 = vld [vmem:[#allocation5 + $0x488] sm:$0xff]
    %v208 = vld [vmem:[#allocation5 + $0x490] sm:$0xff]
    %v209 = vld [vmem:[#allocation5 + $0x498] sm:$0xff]
    %v210 = vld [vmem:[#allocation5 + $0x4a0] sm:$0xff]
    %v211 = vld [vmem:[#allocation5 + $0x4a8] sm:$0xff]
    %v212 = vld [vmem:[#allocation5 + $0x4b0] sm:$0xff]
    %v213 = vld [vmem:[#allocation5 + $0x4b8] sm:$0xff]
    %v214 = vld [vmem:[#allocation5 + $0x4c0] sm:$0xff]
    %v215 = vld [vmem:[#allocation5 + $0x4c8] sm:$0xff]
    %v216 = vld [vmem:[#allocation5 + $0x4d0] sm:$0xff]
    %v217 = vld [vmem:[#allocation5 + $0x4d8] sm:$0xff]
    %v218 = vld [vmem:[#allocation5 + $0x4e0] sm:$0xff]
    %v219 = vld [vmem:[#allocation5 + $0x4e8] sm:$0xff]
    %v220 = vld [vmem:[#allocation5 + $0x4f0] sm:$0xff]
    %v221 = vld [vmem:[#allocation5 + $0x4f8] sm:$0xff]
    %v222 = vld [vmem:[#allocation5 + $0x500] sm:$0xff]
    %v223 = vld [vmem:[#allocation5 + $0x508] sm:$0xff]
    %v224 = vld [vmem:[#allocation5 + $0x510] sm:$0xff]
    %v225 = vld [vmem:[#allocation5 + $0x518] sm:$0xff]
    %v226 = vld [vmem:[#allocation5 + $0x520] sm:$0xff]
    %v227 = vld [vmem:[#allocation5 + $0x528] sm:$0xff]
    %v228 = vld [vmem:[#allocation5 + $0x530] sm:$0xff]
    %v229 = vld [vmem:[#allocation5 + $0x538] sm:$0xff]
    %v230 = vld [vmem:[#allocation5 + $0x540] sm:$0xff]
    %v231 = vld [vmem:[#allocation5 + $0x548] sm:$0xff]
    %v232 = vld [vmem:[#allocation5 + $0x550] sm:$0xff]
    %v233 = vld [vmem:[#allocation5 + $0x558] sm:$0xff]
    %v234 = vld [vmem:[#allocation5 + $0x560] sm:$0xff]
    %v235 = vld [vmem:[#allocation5 + $0x568] sm:$0xff]
    %v236 = vld [vmem:[#allocation5 + $0x570] sm:$0xff]
    %v237 = vld [vmem:[#allocation5 + $0x578] sm:$0xff]
    %v238 = vld [vmem:[#allocation5 + $0x580] sm:$0xff]
    %v239 = vld [vmem:[#allocation5 + $0x588] sm:$0xff]
    %v240 = vld [vmem:[#allocation5 + $0x590] sm:$0xff]
    %v241 = vld [vmem:[#allocation5 + $0x598] sm:$0xff]
    %v242 = vld [vmem:[#allocation5 + $0x5a0] sm:$0xff]
    %v243 = vld [vmem:[#allocation5 + $0x5a8] sm:$0xff]
    %v244 = vld [vmem:[#allocation5 + $0x5b0] sm:$0xff]
    %v245 = vld [vmem:[#allocation5 + $0x5b8] sm:$0xff]
    %v246 = vld [vmem:[#allocation5 + $0x5c0] sm:$0xff]
    %v247 = vld [vmem:[#allocation5 + $0x5c8] sm:$0xff]
    %v248 = vld [vmem:[#allocation5 + $0x5d0] sm:$0xff]
    %v249 = vld [vmem:[#allocation5 + $0x5d8] sm:$0xff]
    %v250 = vld [vmem:[#allocation5 + $0x5e0] sm:$0xff]
    %v251 = vld [vmem:[#allocation5 + $0x5e8] sm:$0xff]
    %v252 = vld [vmem:[#allocation5 + $0x5f0] sm:$0xff]
    %v253 = vld [vmem:[#allocation5 + $0x5f8] sm:$0xff]
    %v254 = vld [vmem:[#allocation5 + $0x600] sm:$0xff]
    %v255 = vld [vmem:[#allocation5 + $0x608] sm:$0xff]
    %v256 = vld [vmem:[#allocation5 + $0x610] sm:$0xff]
    %v257 = vld [vmem:[#allocation5 + $0x618] sm:$0xff]
    %v258 = vld [vmem:[#allocation5 + $0x620] sm:$0xff]
    %v259 = vld [vmem:[#allocation5 + $0x628] sm:$0xff]
    %v260 = vld [vmem:[#allocation5 + $0x630] sm:$0xff]
    %v261 = vld [vmem:[#allocation5 + $0x638] sm:$0xff]
    %v262 = vld [vmem:[#allocation5 + $0x640] sm:$0xff]
    %v263 = vld [vmem:[#allocation5 + $0x648] sm:$0xff]
    %v264 = vld [vmem:[#allocation5 + $0x650] sm:$0xff]
    %v265 = vld [vmem:[#allocation5 + $0x658] sm:$0xff]
    %v266 = vld [vmem:[#allocation5 + $0x660] sm:$0xff]
    %v267 = vld [vmem:[#allocation5 + $0x668] sm:$0xff]
    %v268 = vld [vmem:[#allocation5 + $0x670] sm:$0xff]
    %v269 = vld [vmem:[#allocation5 + $0x678] sm:$0xff]
    %v270 = vld [vmem:[#allocation5 + $0x680] sm:$0xff]
    %v271 = vld [vmem:[#allocation5 + $0x688] sm:$0xff]
    %v272 = vld [vmem:[#allocation5 + $0x690] sm:$0xff]
    %v273 = vld [vmem:[#allocation5 + $0x698] sm:$0xff]
    %v274 = vld [vmem:[#allocation5 + $0x6a0] sm:$0xff]
    %v275 = vld [vmem:[#allocation5 + $0x6a8] sm:$0xff]
    %v276 = vld [vmem:[#allocation5 + $0x6b0] sm:$0xff]
    %v277 = vld [vmem:[#allocation5 + $0x6b8] sm:$0xff]
    %v278 = vld [vmem:[#allocation5 + $0x6c0] sm:$0xff]
    %v279 = vld [vmem:[#allocation5 + $0x6c8] sm:$0xff]
    %v280 = vld [vmem:[#allocation5 + $0x6d0] sm:$0xff]
    %v281 = vld [vmem:[#allocation5 + $0x6d8] sm:$0xff]
    %v282 = vld [vmem:[#allocation5 + $0x6e0] sm:$0xff]
    %v283 = vld [vmem:[#allocation5 + $0x6e8] sm:$0xff]
    %v284 = vld [vmem:[#allocation5 + $0x6f0] sm:$0xff]
    %v285 = vld [vmem:[#allocation5 + $0x6f8] sm:$0xff]
    %v286 = vld [vmem:[#allocation5 + $0x700] sm:$0xff]
    %v287 = vld [vmem:[#allocation5 + $0x708] sm:$0xff]
    %v288 = vld [vmem:[#allocation5 + $0x710] sm:$0xff]
    %v289 = vld [vmem:[#allocation5 + $0x718] sm:$0xff]
    %v290 = vld [vmem:[#allocation5 + $0x720] sm:$0xff]
    %v291 = vld [vmem:[#allocation5 + $0x728] sm:$0xff]
    %v292 = vld [vmem:[#allocation5 + $0x730] sm:$0xff]
    %v293 = vld [vmem:[#allocation5 + $0x738] sm:$0xff]
    %v294 = vld [vmem:[#allocation5 + $0x740] sm:$0xff]
    %v295 = vld [vmem:[#allocation5 + $0x748] sm:$0xff]
    %v296 = vld [vmem:[#allocation5 + $0x750] sm:$0xff]
    %v297 = vld [vmem:[#allocation5 + $0x758] sm:$0xff]
    %v298 = vld [vmem:[#allocation5 + $0x760] sm:$0xff]
    %v299 = vld [vmem:[#allocation5 + $0x768] sm:$0xff]
    %v300 = vld [vmem:[#allocation5 + $0x770] sm:$0xff]
    %v301 = vld [vmem:[#allocation5 + $0x778] sm:$0xff]
    %v302 = vld [vmem:[#allocation5 + $0x780] sm:$0xff]
    %v303 = vld [vmem:[#allocation5 + $0x788] sm:$0xff]
    %v304 = vld [vmem:[#allocation5 + $0x790] sm:$0xff]
    %v305 = vld [vmem:[#allocation5 + $0x798] sm:$0xff]
    %v306 = vld [vmem:[#allocation5 + $0x7a0] sm:$0xff]
    %v307 = vld [vmem:[#allocation5 + $0x7a8] sm:$0xff]
    %v308 = vld [vmem:[#allocation5 + $0x7b0] sm:$0xff]
    %v309 = vld [vmem:[#allocation5 + $0x7b8] sm:$0xff]
    %v310 = vld [vmem:[#allocation5 + $0x7c0] sm:$0xff]
    %v311 = vld [vmem:[#allocation5 + $0x7c8] sm:$0xff]
    %v312 = vld [vmem:[#allocation5 + $0x7d0] sm:$0xff]
    %v313 = vld [vmem:[#allocation5 + $0x7d8] sm:$0xff]
    %v314 = vld [vmem:[#allocation5 + $0x7e0] sm:$0xff]
    %v315 = vld [vmem:[#allocation5 + $0x7e8] sm:$0xff]
    %v316 = vld [vmem:[#allocation5 + $0x7f0] sm:$0xff]
    %v317 = vld [vmem:[#allocation5 + $0x7f8] sm:$0xff]
    %v318 = vld [vmem:[#allocation5 + $0x800] sm:$0xff]
    %v319 = vld [vmem:[#allocation5 + $0x808] sm:$0xff]
    %v320 = vld [vmem:[#allocation5 + $0x810] sm:$0xff]
    %v321 = vld [vmem:[#allocation5 + $0x818] sm:$0xff]
    %v322 = vld [vmem:[#allocation5 + $0x820] sm:$0xff]
    %v323 = vld [vmem:[#allocation5 + $0x828] sm:$0xff]
    %v324 = vld [vmem:[#allocation5 + $0x830] sm:$0xff]
    %v325 = vld [vmem:[#allocation5 + $0x838] sm:$0xff]
    %v326 = vld [vmem:[#allocation5 + $0x840] sm:$0xff]
    %v327 = vld [vmem:[#allocation5 + $0x848] sm:$0xff]
    %v328 = vld [vmem:[#allocation5 + $0x850] sm:$0xff]
    %v329 = vld [vmem:[#allocation5 + $0x858] sm:$0xff]
    %v330 = vld [vmem:[#allocation5 + $0x860] sm:$0xff]
    %v331 = vld [vmem:[#allocation5 + $0x868] sm:$0xff]
    %v332 = vld [vmem:[#allocation5 + $0x870] sm:$0xff]
    %v333 = vld [vmem:[#allocation5 + $0x878] sm:$0xff]
    %v334 = vld [vmem:[#allocation5 + $0x880] sm:$0xff]
    %v335 = vld [vmem:[#allocation5 + $0x888] sm:$0xff]
    %v336 = vld [vmem:[#allocation5 + $0x890] sm:$0xff]
    %v337 = vld [vmem:[#allocation5 + $0x898] sm:$0xff]
    %v338 = vld [vmem:[#allocation5 + $0x8a0] sm:$0xff]
    %v339 = vld [vmem:[#allocation5 + $0x8a8] sm:$0xff]
    %v340 = vld [vmem:[#allocation5 + $0x8b0] sm:$0xff]
    %v341 = vld [vmem:[#allocation5 + $0x8b8] sm:$0xff]
    %v342 = vld [vmem:[#allocation5 + $0x8c0] sm:$0xff]
    %v343 = vld [vmem:[#allocation5 + $0x8c8] sm:$0xff]
    %v344 = vld [vmem:[#allocation5 + $0x8d0] sm:$0xff]
    %v345 = vld [vmem:[#allocation5 + $0x8d8] sm:$0xff]
    %v346 = vld [vmem:[#allocation5 + $0x8e0] sm:$0xff]
    %v347 = vld [vmem:[#allocation5 + $0x8e8] sm:$0xff]
    %v348 = vld [vmem:[#allocation5 + $0x8f0] sm:$0xff]
    %v349 = vld [vmem:[#allocation5 + $0x8f8] sm:$0xff]
    %v350 = vld [vmem:[#allocation5 + $0x900] sm:$0xff]
    %v351 = vld [vmem:[#allocation5 + $0x908] sm:$0xff]
    %v352 = vld [vmem:[#allocation5 + $0x910] sm:$0xff]
    %v353 = vld [vmem:[#allocation5 + $0x918] sm:$0xff]
    %v354 = vld [vmem:[#allocation5 + $0x920] sm:$0xff]
    %v355 = vld [vmem:[#allocation5 + $0x928] sm:$0xff]
    %v356 = vld [vmem:[#allocation5 + $0x930] sm:$0xff]
    %v357 = vld [vmem:[#allocation5 + $0x938] sm:$0xff]
    %v358 = vld [vmem:[#allocation5 + $0x940] sm:$0xff]
    %v359 = vld [vmem:[#allocation5 + $0x948] sm:$0xff]
    %v360 = vld [vmem:[#allocation5 + $0x950] sm:$0xff]
    %v361 = vld [vmem:[#allocation5 + $0x958] sm:$0xff]
    %v362 = vld [vmem:[#allocation5 + $0x960] sm:$0xff]
    %v363 = vld [vmem:[#allocation5 + $0x968] sm:$0xff]
    %v364 = vld [vmem:[#allocation5 + $0x970] sm:$0xff]
    %v365 = vld [vmem:[#allocation5 + $0x978] sm:$0xff]
    %v366 = vld [vmem:[#allocation5 + $0x980] sm:$0xff]
    %v367 = vld [vmem:[#allocation5 + $0x988] sm:$0xff]
    %v368 = vld [vmem:[#allocation5 + $0x990] sm:$0xff]
    %v369 = vld [vmem:[#allocation5 + $0x998] sm:$0xff]
    %v370 = vld [vmem:[#allocation5 + $0x9a0] sm:$0xff]
    %v371 = vld [vmem:[#allocation5 + $0x9a8] sm:$0xff]
    %v372 = vld [vmem:[#allocation5 + $0x9b0] sm:$0xff]
    %v373 = vld [vmem:[#allocation5 + $0x9b8] sm:$0xff]
    %v374 = vld [vmem:[#allocation5 + $0x9c0] sm:$0xff]
    %v375 = vld [vmem:[#allocation5 + $0x9c8] sm:$0xff]
    %v376 = vld [vmem:[#allocation5 + $0x9d0] sm:$0xff]
    %v377 = vld [vmem:[#allocation5 + $0x9d8] sm:$0xff]
    %v378 = vld [vmem:[#allocation5 + $0x9e0] sm:$0xff]
    %v379 = vld [vmem:[#allocation5 + $0x9e8] sm:$0xff]
    %v380 = vld [vmem:[#allocation5 + $0x9f0] sm:$0xff]
    %v381 = vld [vmem:[#allocation5 + $0x9f8] sm:$0xff]
    %v382 = vld [vmem:[#allocation5 + $0xa00] sm:$0xff]
    %v383 = vld [vmem:[#allocation5 + $0xa08] sm:$0xff]
    %v384 = vld [vmem:[#allocation5 + $0xa10] sm:$0xff]
    %v385 = vld [vmem:[#allocation5 + $0xa18] sm:$0xff]
    %v386 = vld [vmem:[#allocation5 + $0xa20] sm:$0xff]
    %v387 = vld [vmem:[#allocation5 + $0xa28] sm:$0xff]
    %v388 = vld [vmem:[#allocation5 + $0xa30] sm:$0xff]
    %v389 = vld [vmem:[#allocation5 + $0xa38] sm:$0xff]
    %v390 = vld [vmem:[#allocation5 + $0xa40] sm:$0xff]
    %v391 = vld [vmem:[#allocation5 + $0xa48] sm:$0xff]
    %v392 = vld [vmem:[#allocation5 + $0xa50] sm:$0xff]
    %v393 = vld [vmem:[#allocation5 + $0xa58] sm:$0xff]
    %v394 = vld [vmem:[#allocation5 + $0xa60] sm:$0xff]
    %v395 = vld [vmem:[#allocation5 + $0xa68] sm:$0xff]
    %v396 = vld [vmem:[#allocation5 + $0xa70] sm:$0xff]
    %v397 = vld [vmem:[#allocation5 + $0xa78] sm:$0xff]
    %v398 = vld [vmem:[#allocation5 + $0xa80] sm:$0xff]
    %v399 = vld [vmem:[#allocation5 + $0xa88] sm:$0xff]
    %v400 = vld [vmem:[#allocation5 + $0xa90] sm:$0xff]
    %v401 = vld [vmem:[#allocation5 + $0xa98] sm:$0xff]
    %v402 = vld [vmem:[#allocation5 + $0xaa0] sm:$0xff]
    %v403 = vld [vmem:[#allocation5 + $0xaa8] sm:$0xff]
    %v404 = vld [vmem:[#allocation5 + $0xab0] sm:$0xff]
    %v405 = vld [vmem:[#allocation5 + $0xab8] sm:$0xff]
    %v406 = vld [vmem:[#allocation5 + $0xac0] sm:$0xff]
    %v407 = vld [vmem:[#allocation5 + $0xac8] sm:$0xff]
    %v408 = vld [vmem:[#allocation5 + $0xad0] sm:$0xff]
    %v409 = vld [vmem:[#allocation5 + $0xad8] sm:$0xff]
    %v410 = vld [vmem:[#allocation5 + $0xae0] sm:$0xff]
    %v411 = vld [vmem:[#allocation5 + $0xae8] sm:$0xff]
    %v412 = vld [vmem:[#allocation5 + $0xaf0] sm:$0xff]
    %v413 = vld [vmem:[#allocation5 + $0xaf8] sm:$0xff]
    %v414 = vld [vmem:[#allocation5 + $0xb00] sm:$0xff]
    %v415 = vld [vmem:[#allocation5 + $0xb08] sm:$0xff]
    %v416 = vld [vmem:[#allocation5 + $0xb10] sm:$0xff]
    %v417 = vld [vmem:[#allocation5 + $0xb18] sm:$0xff]
    %v418 = vld [vmem:[#allocation5 + $0xb20] sm:$0xff]
    %v419 = vld [vmem:[#allocation5 + $0xb28] sm:$0xff]
    %v420 = vld [vmem:[#allocation5 + $0xb30] sm:$0xff]
    %v421 = vld [vmem:[#allocation5 + $0xb38] sm:$0xff]
    %v422 = vld [vmem:[#allocation5 + $0xb40] sm:$0xff]
    %v423 = vld [vmem:[#allocation5 + $0xb48] sm:$0xff]
    %v424 = vld [vmem:[#allocation5 + $0xb50] sm:$0xff]
    %v425 = vld [vmem:[#allocation5 + $0xb58] sm:$0xff]
    %v426 = vld [vmem:[#allocation5 + $0xb60] sm:$0xff]
    %v427 = vld [vmem:[#allocation5 + $0xb68] sm:$0xff]
    %v428 = vld [vmem:[#allocation5 + $0xb70] sm:$0xff]
    %v429 = vld [vmem:[#allocation5 + $0xb78] sm:$0xff]
    %v430 = vld [vmem:[#allocation5 + $0xb80] sm:$0xff]
    %v431 = vld [vmem:[#allocation5 + $0xb88] sm:$0xff]
    %v432 = vld [vmem:[#allocation5 + $0xb90] sm:$0xff]
    %v433 = vld [vmem:[#allocation5 + $0xb98] sm:$0xff]
    %v434 = vld [vmem:[#allocation5 + $0xba0] sm:$0xff]
    %v435 = vld [vmem:[#allocation5 + $0xba8] sm:$0xff]
    %v436 = vld [vmem:[#allocation5 + $0xbb0] sm:$0xff]
    %v437 = vld [vmem:[#allocation5 + $0xbb8] sm:$0xff]
    %v438 = vld [vmem:[#allocation5 + $0xbc0] sm:$0xff]
    %v439 = vld [vmem:[#allocation5 + $0xbc8] sm:$0xff]
    %v440 = vld [vmem:[#allocation5 + $0xbd0] sm:$0xff]
    %v441 = vld [vmem:[#allocation5 + $0xbd8] sm:$0xff]
    %v442 = vld [vmem:[#allocation5 + $0xbe0] sm:$0xff]
    %v443 = vld [vmem:[#allocation5 + $0xbe8] sm:$0xff]
    %v444 = vld [vmem:[#allocation5 + $0xbf0] sm:$0xff]
    %v445 = vld [vmem:[#allocation5 + $0xbf8] sm:$0xff]
    %v446 = vld [vmem:[#allocation5 + $0xc00] sm:$0xff]
    %v447 = vld [vmem:[#allocation5 + $0xc08] sm:$0xff]
    %v448 = vld [vmem:[#allocation5 + $0xc10] sm:$0xff]
    %v449 = vld [vmem:[#allocation5 + $0xc18] sm:$0xff]
    %v450 = vld [vmem:[#allocation5 + $0xc20] sm:$0xff]
    %v451 = vld [vmem:[#allocation5 + $0xc28] sm:$0xff]
    %v452 = vld [vmem:[#allocation5 + $0xc30] sm:$0xff]
    %v453 = vld [vmem:[#allocation5 + $0xc38] sm:$0xff]
    %v454 = vld [vmem:[#allocation7] sm:$0xf]
    %v456 = vlaneseq
    %v457 = vshrl.u32 %v456, 7
    %v458 = vsub.s32 0, %v457
    %v459 = vrot.slane %v454, %v458
    %v460 = vlaneseq
    %v461 = vshrl.u32 %v460, 7
    %v462 = vsub.s32 1, %v461
    %v463 = vrot.slane %v454, %v462
    %v464 = vlaneseq
    %v465 = vshrl.u32 %v464, 7
    %v466 = vsub.s32 2, %v465
    %v467 = vrot.slane %v454, %v466
    %v468 = vlaneseq
    %v469 = vshrl.u32 %v468, 7
    %v470 = vsub.s32 3, %v469
    %v471 = vrot.slane %v454, %v470
    %v480 = vcombine.high %v58, %v58
    %v481 = vcombine.high %v59, %v59
    %v482 = vcombine.high %v60, %v60
    %vm486 = vcmask 130048
    %v487 = vsel %vm486, %v61, 0
    %489 = vmatprep.subr.mxu0 %v63
    %490 = vmatpush1.msra.mxu0 %v62
    %491 = vmatprep.subr.mxu0 %v67
    %492 = vmatpush1.msra.mxu0 %v66
    %493 = vmatprep.subr.mxu0 %v71
    %494 = vmatpush1.msra.mxu0 %v70
    %495 = vmatprep.subr.mxu0 %v75
    %496 = vmatpush1.msra.mxu0 %v74
    %497 = vmatprep.subr.mxu0 %v79
    %498 = vmatpush1.msra.mxu0 %v78
    %499 = vmatprep.subr.mxu0 %v83
    %500 = vmatpush1.msra.mxu0 %v82
    %501 = vmatprep.subr.mxu0 %v87
    %502 = vmatpush1.msra.mxu0 %v86
    %503 = vmatprep.subr.mxu0 %v91
    %504 = vmatpush1.msra.mxu0 %v90
    %505 = vmatprep.subr.mxu0 %v95
    %506 = vmatpush1.msra.mxu0 %v94
    %507 = vmatprep.subr.mxu0 %v99
    %508 = vmatpush1.msra.mxu0 %v98
    %509 = vmatprep.subr.mxu0 %v103
    %510 = vmatpush1.msra.mxu0 %v102
    %511 = vmatprep.subr.mxu0 %v107
    %512 = vmatpush1.msra.mxu0 %v106
    %513 = vmatprep.subr.mxu0 %v111
    %514 = vmatpush1.msra.mxu0 %v110
    %515 = vmatprep.subr.mxu0 %v115
    %516 = vmatpush1.msra.mxu0 %v114
    %517 = vmatprep.subr.mxu0 %v119
    %518 = vmatpush1.msra.mxu0 %v118
    %519 = vmatprep.subr.mxu0 %v123
    %520 = vmatpush1.msra.mxu0 %v122
    %521 = vmatprep.subr.mxu0 %v127
    %522 = vmatpush1.msra.mxu0 %v126
    %523 = vmatprep.subr.mxu0 %v131
    %524 = vmatpush1.msra.mxu0 %v130
    %525 = vmatprep.subr.mxu0 %v135
    %526 = vmatpush1.msra.mxu0 %v134
    %527 = vmatprep.subr.mxu0 %v139
    %528 = vmatpush1.msra.mxu0 %v138
    %529 = vmatprep.subr.mxu0 %v143
    %530 = vmatpush1.msra.mxu0 %v142
    %531 = vmatprep.subr.mxu0 %v147
    %532 = vmatpush1.msra.mxu0 %v146
    %533 = vmatprep.subr.mxu0 %v151
    %534 = vmatpush1.msra.mxu0 %v150
    %535 = vmatprep.subr.mxu0 %v155
    %536 = vmatpush1.msra.mxu0 %v154
    %537 = vmatprep.subr.mxu0 %v159
    %538 = vmatpush1.msra.mxu0 %v158
    %539 = vmatprep.subr.mxu0 %v163
    %540 = vmatpush1.msra.mxu0 %v162
    %541 = vmatprep.subr.mxu0 %v167
    %542 = vmatpush1.msra.mxu0 %v166
    %543 = vmatprep.subr.mxu0 %v171
    %544 = vmatpush1.msra.mxu0 %v170
    %545 = vmatprep.subr.mxu0 %v175
    %546 = vmatpush1.msra.mxu0 %v174
    %547 = vmatprep.subr.mxu0 %v179
    %548 = vmatpush1.msra.mxu0 %v178
    %549 = vmatprep.subr.mxu0 %v183
    %550 = vmatpush1.msra.mxu0 %v182
    %551 = vmatprep.subr.mxu0 %v187
    %552 = vmatpush1.msra.mxu0 %v186
    %553 = vmatprep.mubr.f32.mxu0 %v480
    %554 = vmatmul.mubr.f32.gmra.mrb[0].mxu0 %v58
    %v555 = vpop.f32.mrb[0].mxu0
    %v556 = vadd.f32 %v459, %v555
    %v557 = vpop.f32.mrb[0].mxu0
    %v558 = vadd.f32 %v463, %v557
    %559 = vdwg.mxu0
    %560 = vmatprep.subr.mxu0 %v191
    %561 = vmatpush1.msra.mxu0 %v190
    %562 = vmatprep.subr.mxu0 %v195
    %563 = vmatpush1.msra.mxu0 %v194
    %564 = vmatprep.subr.mxu0 %v199
    %565 = vmatpush1.msra.mxu0 %v198
    %566 = vmatprep.subr.mxu0 %v203
    %567 = vmatpush1.msra.mxu0 %v202
    %568 = vmatprep.subr.mxu0 %v207
    %569 = vmatpush1.msra.mxu0 %v206
    %570 = vmatprep.subr.mxu0 %v211
    %571 = vmatpush1.msra.mxu0 %v210
    %572 = vmatprep.subr.mxu0 %v215
    %573 = vmatpush1.msra.mxu0 %v214
    %574 = vmatprep.subr.mxu0 %v219
    %575 = vmatpush1.msra.mxu0 %v218
    %576 = vmatprep.subr.mxu0 %v223
    %577 = vmatpush1.msra.mxu0 %v222
    %578 = vmatprep.subr.mxu0 %v227
    %579 = vmatpush1.msra.mxu0 %v226
    %580 = vmatprep.subr.mxu0 %v231
    %581 = vmatpush1.msra.mxu0 %v230
    %582 = vmatprep.subr.mxu0 %v235
    %583 = vmatpush1.msra.mxu0 %v234
    %584 = vmatprep.subr.mxu0 %v239
    %585 = vmatpush1.msra.mxu0 %v238
    %586 = vmatprep.subr.mxu0 %v243
    %587 = vmatpush1.msra.mxu0 %v242
    %588 = vmatprep.subr.mxu0 %v247
    %589 = vmatpush1.msra.mxu0 %v246
    %590 = vmatprep.subr.mxu0 %v251
    %591 = vmatpush1.msra.mxu0 %v250
    %592 = vmatprep.subr.mxu0 %v255
    %593 = vmatpush1.msra.mxu0 %v254
    %594 = vmatprep.subr.mxu0 %v259
    %595 = vmatpush1.msra.mxu0 %v258
    %596 = vmatprep.subr.mxu0 %v263
    %597 = vmatpush1.msra.mxu0 %v262
    %598 = vmatprep.subr.mxu0 %v267
    %599 = vmatpush1.msra.mxu0 %v266
    %600 = vmatprep.subr.mxu0 %v271
    %601 = vmatpush1.msra.mxu0 %v270
    %602 = vmatprep.subr.mxu0 %v275
    %603 = vmatpush1.msra.mxu0 %v274
    %604 = vmatprep.subr.mxu0 %v279
    %605 = vmatpush1.msra.mxu0 %v278
    %606 = vmatprep.subr.mxu0 %v283
    %607 = vmatpush1.msra.mxu0 %v282
    %608 = vmatprep.subr.mxu0 %v287
    %609 = vmatpush1.msra.mxu0 %v286
    %610 = vmatprep.subr.mxu0 %v291
    %611 = vmatpush1.msra.mxu0 %v290
    %612 = vmatprep.subr.mxu0 %v295
    %613 = vmatpush1.msra.mxu0 %v294
    %614 = vmatprep.subr.mxu0 %v299
    %615 = vmatpush1.msra.mxu0 %v298
    %616 = vmatprep.subr.mxu0 %v303
    %617 = vmatpush1.msra.mxu0 %v302
    %618 = vmatprep.subr.mxu0 %v307
    %619 = vmatpush1.msra.mxu0 %v306
    %620 = vmatprep.subr.mxu0 %v311
    %621 = vmatpush1.msra.mxu0 %v310
    %622 = vmatprep.subr.mxu0 %v315
    %623 = vmatpush1.msra.mxu0 %v314
    %624 = vmatprep.mubr.f32.mxu0 %v481
    %625 = vmatmul.mubr.f32.gmra.mrb[0].mxu0 %v59
    %v626 = vpop.f32.mrb[0].mxu0
    %v627 = vadd.f32 %v556, %v626
    %v628 = vpop.f32.mrb[0].mxu0
    %v629 = vadd.f32 %v558, %v628
    %630 = vdwg.mxu0
    %631 = vmatprep.subr.mxu0 %v319
    %632 = vmatpush1.msra.mxu0 %v318
    %633 = vmatprep.subr.mxu0 %v323
    %634 = vmatpush1.msra.mxu0 %v322
    %635 = vmatprep.subr.mxu0 %v327
    %636 = vmatpush1.msra.mxu0 %v326
    %637 = vmatprep.subr.mxu0 %v331
    %638 = vmatpush1.msra.mxu0 %v330
    %639 = vmatprep.subr.mxu0 %v335
    %640 = vmatpush1.msra.mxu0 %v334
    %641 = vmatprep.subr.mxu0 %v339
    %642 = vmatpush1.msra.mxu0 %v338
    %643 = vmatprep.subr.mxu0 %v343
    %644 = vmatpush1.msra.mxu0 %v342
    %645 = vmatprep.subr.mxu0 %v347
    %646 = vmatpush1.msra.mxu0 %v346
    %647 = vmatprep.subr.mxu0 %v351
    %648 = vmatpush1.msra.mxu0 %v350
    %649 = vmatprep.subr.mxu0 %v355
    %650 = vmatpush1.msra.mxu0 %v354
    %651 = vmatprep.subr.mxu0 %v359
    %652 = vmatpush1.msra.mxu0 %v358
    %653 = vmatprep.subr.mxu0 %v363
    %654 = vmatpush1.msra.mxu0 %v362
    %655 = vmatprep.subr.mxu0 %v367
    %656 = vmatpush1.msra.mxu0 %v366
    %657 = vmatprep.subr.mxu0 %v371
    %658 = vmatpush1.msra.mxu0 %v370
    %659 = vmatprep.subr.mxu0 %v375
    %660 = vmatpush1.msra.mxu0 %v374
    %661 = vmatprep.subr.mxu0 %v379
    %662 = vmatpush1.msra.mxu0 %v378
    %663 = vmatprep.subr.mxu0 %v383
    %664 = vmatpush1.msra.mxu0 %v382
    %665 = vmatprep.subr.mxu0 %v387
    %666 = vmatpush1.msra.mxu0 %v386
    %667 = vmatprep.subr.mxu0 %v391
    %668 = vmatpush1.msra.mxu0 %v390
    %669 = vmatprep.subr.mxu0 %v395
    %670 = vmatpush1.msra.mxu0 %v394
    %671 = vmatprep.subr.mxu0 %v399
    %672 = vmatpush1.msra.mxu0 %v398
    %673 = vmatprep.subr.mxu0 %v403
    %674 = vmatpush1.msra.mxu0 %v402
    %675 = vmatprep.subr.mxu0 %v407
    %676 = vmatpush1.msra.mxu0 %v406
    %677 = vmatprep.subr.mxu0 %v411
    %678 = vmatpush1.msra.mxu0 %v410
    %679 = vmatprep.subr.mxu0 %v415
    %680 = vmatpush1.msra.mxu0 %v414
    %681 = vmatprep.subr.mxu0 %v419
    %682 = vmatpush1.msra.mxu0 %v418
    %683 = vmatprep.subr.mxu0 %v423
    %684 = vmatpush1.msra.mxu0 %v422
    %685 = vmatprep.subr.mxu0 %v427
    %686 = vmatpush1.msra.mxu0 %v426
    %687 = vmatprep.subr.mxu0 %v431
    %688 = vmatpush1.msra.mxu0 %v430
    %689 = vmatprep.subr.mxu0 %v435
    %690 = vmatpush1.msra.mxu0 %v434
    %691 = vmatprep.subr.mxu0 %v439
    %692 = vmatpush1.msra.mxu0 %v438
    %693 = vmatprep.subr.mxu0 %v443
    %694 = vmatpush1.msra.mxu0 %v442
    %695 = vmatprep.mubr.f32.mxu0 %v482
    %696 = vmatmul.mubr.f32.gmra.mrb[0].mxu0 %v60
    %v697 = vpop.f32.mrb[0].mxu0
    %v698 = vadd.f32 %v627, %v697
    %v699 = vpop.f32.mrb[0].mxu0
    %v700 = vadd.f32 %v629, %v699
    %701 = vdwg.mxu0
    %702 = vmatprep.subr.mxu0 %v447
    %703 = vmatpush1.msra.mxu0 %v446
    %704 = vmatprep.subr.mxu0 %v451
    %705 = vmatpush1.msra.mxu0 %v450
    %706 = vmatprep.subr.mxu0 0.0
    %707 = vmatpush1.msra.mxu0 0.0
    %708 = vmatprep.subr.mxu0 0.0
    %709 = vmatpush1.msra.mxu0 0.0
    %710 = vmatprep.subr.mxu0 0.0
    %711 = vmatpush1.msra.mxu0 0.0
    %712 = vmatprep.subr.mxu0 0.0
    %713 = vmatpush1.msra.mxu0 0.0
    %714 = vmatprep.subr.mxu0 0.0
    %715 = vmatpush1.msra.mxu0 0.0
    %716 = vmatprep.subr.mxu0 0.0
    %717 = vmatpush1.msra.mxu0 0.0
    %718 = vmatprep.subr.mxu0 0.0
    %719 = vmatpush1.msra.mxu0 0.0
    %720 = vmatprep.subr.mxu0 0.0
    %721 = vmatpush1.msra.mxu0 0.0
    %722 = vmatprep.subr.mxu0 0.0
    %723 = vmatpush1.msra.mxu0 0.0
    %724 = vmatprep.subr.mxu0 0.0
    %725 = vmatpush1.msra.mxu0 0.0
    %726 = vmatprep.subr.mxu0 0.0
    %727 = vmatpush1.msra.mxu0 0.0
    %728 = vmatprep.subr.mxu0 0.0
    %729 = vmatpush1.msra.mxu0 0.0
    %730 = vmatprep.subr.mxu0 0.0
    %731 = vmatpush1.msra.mxu0 0.0
    %732 = vmatprep.subr.mxu0 0.0
    %733 = vmatpush1.msra.mxu0 0.0
    %734 = vmatprep.subr.mxu0 0.0
    %735 = vmatpush1.msra.mxu0 0.0
    %736 = vmatprep.subr.mxu0 0.0
    %737 = vmatpush1.msra.mxu0 0.0
    %738 = vmatprep.subr.mxu0 0.0
    %739 = vmatpush1.msra.mxu0 0.0
    %740 = vmatprep.subr.mxu0 0.0
    %741 = vmatpush1.msra.mxu0 0.0
    %742 = vmatprep.subr.mxu0 0.0
    %743 = vmatpush1.msra.mxu0 0.0
    %744 = vmatprep.subr.mxu0 0.0
    %745 = vmatpush1.msra.mxu0 0.0
    %746 = vmatprep.subr.mxu0 0.0
    %747 = vmatpush1.msra.mxu0 0.0
    %748 = vmatprep.subr.mxu0 0.0
    %749 = vmatpush1.msra.mxu0 0.0
    %750 = vmatprep.subr.mxu0 0.0
    %751 = vmatpush1.msra.mxu0 0.0
    %752 = vmatprep.subr.mxu0 0.0
    %753 = vmatpush1.msra.mxu0 0.0
    %754 = vmatprep.subr.mxu0 0.0
    %755 = vmatpush1.msra.mxu0 0.0
    %756 = vmatprep.subr.mxu0 0.0
    %757 = vmatpush1.msra.mxu0 0.0
    %758 = vmatprep.subr.mxu0 0.0
    %759 = vmatpush1.msra.mxu0 0.0
    %760 = vmatprep.subr.mxu0 0.0
    %761 = vmatpush1.msra.mxu0 0.0
    %762 = vmatprep.subr.mxu0 0.0
    %763 = vmatpush1.msra.mxu0 0.0
    %764 = vmatprep.subr.mxu0 0.0
    %765 = vmatpush1.msra.mxu0 0.0
    %766 = vmatprep.mubr.f32.mxu0 0.0
    %767 = vmatmul.mubr.f32.gmra.mrb[0].mxu0 %v487
    %v768 = vpop.f32.mrb[0].mxu0
    %v769 = vadd.f32 %v698, %v768
    %v770 = vpop.f32.mrb[0].mxu0
    %v771 = vadd.f32 %v700, %v770
    %772 = vdwg.mxu0
    %773 = vmatprep.subr.mxu0 %v65
    %774 = vmatpush1.msra.mxu0 %v64
    %775 = vmatprep.subr.mxu0 %v69
    %776 = vmatpush1.msra.mxu0 %v68
    %777 = vmatprep.subr.mxu0 %v73
    %778 = vmatpush1.msra.mxu0 %v72
    %779 = vmatprep.subr.mxu0 %v77
    %780 = vmatpush1.msra.mxu0 %v76
    %781 = vmatprep.subr.mxu0 %v81
    %782 = vmatpush1.msra.mxu0 %v80
    %783 = vmatprep.subr.mxu0 %v85
    %784 = vmatpush1.msra.mxu0 %v84
    %785 = vmatprep.subr.mxu0 %v89
    %786 = vmatpush1.msra.mxu0 %v88
    %787 = vmatprep.subr.mxu0 %v93
    %788 = vmatpush1.msra.mxu0 %v92
    %789 = vmatprep.subr.mxu0 %v97
    %790 = vmatpush1.msra.mxu0 %v96
    %791 = vmatprep.subr.mxu0 %v101
    %792 = vmatpush1.msra.mxu0 %v100
    %793 = vmatprep.subr.mxu0 %v105
    %794 = vmatpush1.msra.mxu0 %v104
    %795 = vmatprep.subr.mxu0 %v109
    %796 = vmatpush1.msra.mxu0 %v108
    %797 = vmatprep.subr.mxu0 %v113
    %798 = vmatpush1.msra.mxu0 %v112
    %799 = vmatprep.subr.mxu0 %v117
    %800 = vmatpush1.msra.mxu0 %v116
    %801 = vmatprep.subr.mxu0 %v121
    %802 = vmatpush1.msra.mxu0 %v120
    %803 = vmatprep.subr.mxu0 %v125
    %804 = vmatpush1.msra.mxu0 %v124
    %805 = vmatprep.subr.mxu0 %v129
    %806 = vmatpush1.msra.mxu0 %v128
    %807 = vmatprep.subr.mxu0 %v133
    %808 = vmatpush1.msra.mxu0 %v132
    %809 = vmatprep.subr.mxu0 %v137
    %810 = vmatpush1.msra.mxu0 %v136
    %811 = vmatprep.subr.mxu0 %v141
    %812 = vmatpush1.msra.mxu0 %v140
    %813 = vmatprep.subr.mxu0 %v145
    %814 = vmatpush1.msra.mxu0 %v144
    %815 = vmatprep.subr.mxu0 %v149
    %816 = vmatpush1.msra.mxu0 %v148
    %817 = vmatprep.subr.mxu0 %v153
    %818 = vmatpush1.msra.mxu0 %v152
    %819 = vmatprep.subr.mxu0 %v157
    %820 = vmatpush1.msra.mxu0 %v156
    %821 = vmatprep.subr.mxu0 %v161
    %822 = vmatpush1.msra.mxu0 %v160
    %823 = vmatprep.subr.mxu0 %v165
    %824 = vmatpush1.msra.mxu0 %v164
    %825 = vmatprep.subr.mxu0 %v169
    %826 = vmatpush1.msra.mxu0 %v168
    %827 = vmatprep.subr.mxu0 %v173
    %828 = vmatpush1.msra.mxu0 %v172
    %829 = vmatprep.subr.mxu0 %v177
    %830 = vmatpush1.msra.mxu0 %v176
    %831 = vmatprep.subr.mxu0 %v181
    %832 = vmatpush1.msra.mxu0 %v180
    %833 = vmatprep.subr.mxu0 %v185
    %834 = vmatpush1.msra.mxu0 %v184
    %835 = vmatprep.subr.mxu0 %v189
    %836 = vmatpush1.msra.mxu0 %v188
    %837 = vmatprep.mubr.f32.mxu0 %v480
    %838 = vmatmul.mubr.f32.gmra.mrb[0].mxu0 %v58
    %v839 = vpop.f32.mrb[0].mxu0
    %v840 = vadd.f32 %v467, %v839
    %v841 = vpop.f32.mrb[0].mxu0
    %v842 = vadd.f32 %v471, %v841
    %843 = vdwg.mxu0
    %844 = vmatprep.subr.mxu0 %v193
    %845 = vmatpush1.msra.mxu0 %v192
    %846 = vmatprep.subr.mxu0 %v197
    %847 = vmatpush1.msra.mxu0 %v196
    %848 = vmatprep.subr.mxu0 %v201
    %849 = vmatpush1.msra.mxu0 %v200
    %850 = vmatprep.subr.mxu0 %v205
    %851 = vmatpush1.msra.mxu0 %v204
    %852 = vmatprep.subr.mxu0 %v209
    %853 = vmatpush1.msra.mxu0 %v208
    %854 = vmatprep.subr.mxu0 %v213
    %855 = vmatpush1.msra.mxu0 %v212
    %856 = vmatprep.subr.mxu0 %v217
    %857 = vmatpush1.msra.mxu0 %v216
    %858 = vmatprep.subr.mxu0 %v221
    %859 = vmatpush1.msra.mxu0 %v220
    %860 = vmatprep.subr.mxu0 %v225
    %861 = vmatpush1.msra.mxu0 %v224
    %862 = vmatprep.subr.mxu0 %v229
    %863 = vmatpush1.msra.mxu0 %v228
    %864 = vmatprep.subr.mxu0 %v233
    %865 = vmatpush1.msra.mxu0 %v232
    %866 = vmatprep.subr.mxu0 %v237
    %867 = vmatpush1.msra.mxu0 %v236
    %868 = vmatprep.subr.mxu0 %v241
    %869 = vmatpush1.msra.mxu0 %v240
    %870 = vmatprep.subr.mxu0 %v245
    %871 = vmatpush1.msra.mxu0 %v244
    %872 = vmatprep.subr.mxu0 %v249
    %873 = vmatpush1.msra.mxu0 %v248
    %874 = vmatprep.subr.mxu0 %v253
    %875 = vmatpush1.msra.mxu0 %v252
    %876 = vmatprep.subr.mxu0 %v257
    %877 = vmatpush1.msra.mxu0 %v256
    %878 = vmatprep.subr.mxu0 %v261
    %879 = vmatpush1.msra.mxu0 %v260
    %880 = vmatprep.subr.mxu0 %v265
    %881 = vmatpush1.msra.mxu0 %v264
    %882 = vmatprep.subr.mxu0 %v269
    %883 = vmatpush1.msra.mxu0 %v268
    %884 = vmatprep.subr.mxu0 %v273
    %885 = vmatpush1.msra.mxu0 %v272
    %886 = vmatprep.subr.mxu0 %v277
    %887 = vmatpush1.msra.mxu0 %v276
    %888 = vmatprep.subr.mxu0 %v281
    %889 = vmatpush1.msra.mxu0 %v280
    %890 = vmatprep.subr.mxu0 %v285
    %891 = vmatpush1.msra.mxu0 %v284
    %892 = vmatprep.subr.mxu0 %v289
    %893 = vmatpush1.msra.mxu0 %v288
    %894 = vmatprep.subr.mxu0 %v293
    %895 = vmatpush1.msra.mxu0 %v292
    %896 = vmatprep.subr.mxu0 %v297
    %897 = vmatpush1.msra.mxu0 %v296
    %898 = vmatprep.subr.mxu0 %v301
    %899 = vmatpush1.msra.mxu0 %v300
    %900 = vmatprep.subr.mxu0 %v305
    %901 = vmatpush1.msra.mxu0 %v304
    %902 = vmatprep.subr.mxu0 %v309
    %903 = vmatpush1.msra.mxu0 %v308
    %904 = vmatprep.subr.mxu0 %v313
    %905 = vmatpush1.msra.mxu0 %v312
    %906 = vmatprep.subr.mxu0 %v317
    %907 = vmatpush1.msra.mxu0 %v316
    %908 = vmatprep.mubr.f32.mxu0 %v481
    %909 = vmatmul.mubr.f32.gmra.mrb[0].mxu0 %v59
    %v910 = vpop.f32.mrb[0].mxu0
    %v911 = vadd.f32 %v840, %v910
    %v912 = vpop.f32.mrb[0].mxu0
    %v913 = vadd.f32 %v842, %v912
    %914 = vdwg.mxu0
    %915 = vmatprep.subr.mxu0 %v321
    %916 = vmatpush1.msra.mxu0 %v320
    %917 = vmatprep.subr.mxu0 %v325
    %918 = vmatpush1.msra.mxu0 %v324
    %919 = vmatprep.subr.mxu0 %v329
    %920 = vmatpush1.msra.mxu0 %v328
    %921 = vmatprep.subr.mxu0 %v333
    %922 = vmatpush1.msra.mxu0 %v332
    %923 = vmatprep.subr.mxu0 %v337
    %924 = vmatpush1.msra.mxu0 %v336
    %925 = vmatprep.subr.mxu0 %v341
    %926 = vmatpush1.msra.mxu0 %v340
    %927 = vmatprep.subr.mxu0 %v345
    %928 = vmatpush1.msra.mxu0 %v344
    %929 = vmatprep.subr.mxu0 %v349
    %930 = vmatpush1.msra.mxu0 %v348
    %931 = vmatprep.subr.mxu0 %v353
    %932 = vmatpush1.msra.mxu0 %v352
    %933 = vmatprep.subr.mxu0 %v357
    %934 = vmatpush1.msra.mxu0 %v356
    %935 = vmatprep.subr.mxu0 %v361
    %936 = vmatpush1.msra.mxu0 %v360
    %937 = vmatprep.subr.mxu0 %v365
    %938 = vmatpush1.msra.mxu0 %v364
    %939 = vmatprep.subr.mxu0 %v369
    %940 = vmatpush1.msra.mxu0 %v368
    %941 = vmatprep.subr.mxu0 %v373
    %942 = vmatpush1.msra.mxu0 %v372
    %943 = vmatprep.subr.mxu0 %v377
    %944 = vmatpush1.msra.mxu0 %v376
    %945 = vmatprep.subr.mxu0 %v381
    %946 = vmatpush1.msra.mxu0 %v380
    %947 = vmatprep.subr.mxu0 %v385
    %948 = vmatpush1.msra.mxu0 %v384
    %949 = vmatprep.subr.mxu0 %v389
    %950 = vmatpush1.msra.mxu0 %v388
    %951 = vmatprep.subr.mxu0 %v393
    %952 = vmatpush1.msra.mxu0 %v392
    %953 = vmatprep.subr.mxu0 %v397
    %954 = vmatpush1.msra.mxu0 %v396
    %955 = vmatprep.subr.mxu0 %v401
    %956 = vmatpush1.msra.mxu0 %v400
    %957 = vmatprep.subr.mxu0 %v405
    %958 = vmatpush1.msra.mxu0 %v404
    %959 = vmatprep.subr.mxu0 %v409
    %960 = vmatpush1.msra.mxu0 %v408
    %961 = vmatprep.subr.mxu0 %v413
    %962 = vmatpush1.msra.mxu0 %v412
    %963 = vmatprep.subr.mxu0 %v417
    %964 = vmatpush1.msra.mxu0 %v416
    %965 = vmatprep.subr.mxu0 %v421
    %966 = vmatpush1.msra.mxu0 %v420
    %967 = vmatprep.subr.mxu0 %v425
    %968 = vmatpush1.msra.mxu0 %v424
    %969 = vmatprep.subr.mxu0 %v429
    %970 = vmatpush1.msra.mxu0 %v428
    %971 = vmatprep.subr.mxu0 %v433
    %972 = vmatpush1.msra.mxu0 %v432
    %973 = vmatprep.subr.mxu0 %v437
    %974 = vmatpush1.msra.mxu0 %v436
    %975 = vmatprep.subr.mxu0 %v441
    %976 = vmatpush1.msra.mxu0 %v440
    %977 = vmatprep.subr.mxu0 %v445
    %978 = vmatpush1.msra.mxu0 %v444
    %979 = vmatprep.mubr.f32.mxu0 %v482
    %980 = vmatmul.mubr.f32.gmra.mrb[0].mxu0 %v60
    %v981 = vpop.f32.mrb[0].mxu0
    %v982 = vadd.f32 %v911, %v981
    %v983 = vpop.f32.mrb[0].mxu0
    %v984 = vadd.f32 %v913, %v983
    %985 = vdwg.mxu0
    %986 = vmatprep.subr.mxu0 %v449
    %987 = vmatpush1.msra.mxu0 %v448
    %988 = vmatprep.subr.mxu0 %v453
    %989 = vmatpush1.msra.mxu0 %v452
    %990 = vmatprep.subr.mxu0 0.0
    %991 = vmatpush1.msra.mxu0 0.0
    %992 = vmatprep.subr.mxu0 0.0
    %993 = vmatpush1.msra.mxu0 0.0
    %994 = vmatprep.subr.mxu0 0.0
    %995 = vmatpush1.msra.mxu0 0.0
    %996 = vmatprep.subr.mxu0 0.0
    %997 = vmatpush1.msra.mxu0 0.0
    %998 = vmatprep.subr.mxu0 0.0
    %999 = vmatpush1.msra.mxu0 0.0
    %1000 = vmatprep.subr.mxu0 0.0
    %1001 = vmatpush1.msra.mxu0 0.0
    %1002 = vmatprep.subr.mxu0 0.0
    %1003 = vmatpush1.msra.mxu0 0.0
    %1004 = vmatprep.subr.mxu0 0.0
    %1005 = vmatpush1.msra.mxu0 0.0
    %1006 = vmatprep.subr.mxu0 0.0
    %1007 = vmatpush1.msra.mxu0 0.0
    %1008 = vmatprep.subr.mxu0 0.0
    %1009 = vmatpush1.msra.mxu0 0.0
    %1010 = vmatprep.subr.mxu0 0.0
    %1011 = vmatpush1.msra.mxu0 0.0
    %1012 = vmatprep.subr.mxu0 0.0
    %1013 = vmatpush1.msra.mxu0 0.0
    %1014 = vmatprep.subr.mxu0 0.0
    %1015 = vmatpush1.msra.mxu0 0.0
    %1016 = vmatprep.subr.mxu0 0.0
    %1017 = vmatpush1.msra.mxu0 0.0
    %1018 = vmatprep.subr.mxu0 0.0
    %1019 = vmatpush1.msra.mxu0 0.0
    %1020 = vmatprep.subr.mxu0 0.0
    %1021 = vmatpush1.msra.mxu0 0.0
    %1022 = vmatprep.subr.mxu0 0.0
    %1023 = vmatpush1.msra.mxu0 0.0
    %1024 = vmatprep.subr.mxu0 0.0
    %1025 = vmatpush1.msra.mxu0 0.0
    %1026 = vmatprep.subr.mxu0 0.0
    %1027 = vmatpush1.msra.mxu0 0.0
    %1028 = vmatprep.subr.mxu0 0.0
    %1029 = vmatpush1.msra.mxu0 0.0
    %1030 = vmatprep.subr.mxu0 0.0
    %1031 = vmatpush1.msra.mxu0 0.0
    %1032 = vmatprep.subr.mxu0 0.0
    %1033 = vmatpush1.msra.mxu0 0.0
    %1034 = vmatprep.subr.mxu0 0.0
    %1035 = vmatpush1.msra.mxu0 0.0
    %1036 = vmatprep.subr.mxu0 0.0
    %1037 = vmatpush1.msra.mxu0 0.0
    %1038 = vmatprep.subr.mxu0 0.0
    %1039 = vmatpush1.msra.mxu0 0.0
    %1040 = vmatprep.subr.mxu0 0.0
    %1041 = vmatpush1.msra.mxu0 0.0
    %1042 = vmatprep.subr.mxu0 0.0
    %1043 = vmatpush1.msra.mxu0 0.0
    %1044 = vmatprep.subr.mxu0 0.0
    %1045 = vmatpush1.msra.mxu0 0.0
    %1046 = vmatprep.subr.mxu0 0.0
    %1047 = vmatpush1.msra.mxu0 0.0
    %1048 = vmatprep.subr.mxu0 0.0
    %1049 = vmatpush1.msra.mxu0 0.0
    %1050 = vmatprep.mubr.f32.mxu0 0.0
    %1051 = vmatmul.mubr.f32.gmra.mrb[0].mxu0 %v487
    %v1052 = vpop.f32.mrb[0].mxu0
    %v1053 = vadd.f32 %v982, %v1052
    %v1054 = vpop.f32.mrb[0].mxu0
    %v1055 = vadd.f32 %v984, %v1054
    %1056 = vdwg.mxu0
    %v1057 = vld [vmem:[%s3] sm:$0xff]
    %v1058 = vld [vmem:[%s3 + $0x8] sm:$0xff]
    %v1059 = vld [vmem:[%s3 + $0x10] sm:$0xff]
    %v1060 = vld [vmem:[%s3 + $0x18] sm:$0xff]
    %v1061 = vld [vmem:[%s3 + $0x20] sm:$0xff]
    %v1062 = vld [vmem:[%s3 + $0x28] sm:$0xff]
    %v1063 = vld [vmem:[%s3 + $0x30] sm:$0xff]
    %v1064 = vld [vmem:[%s3 + $0x38] sm:$0xff]
    %v1065 = vld [vmem:[%s3 + $0x40] sm:$0xff]
    %v1066 = vld [vmem:[%s3 + $0x48] sm:$0xff]
    %v1067 = vld [vmem:[%s3 + $0x50] sm:$0xff]
    %v1068 = vld [vmem:[%s3 + $0x58] sm:$0xff]
    %v1069 = vld [vmem:[%s3 + $0x60] sm:$0xff]
    %v1070 = vld [vmem:[%s3 + $0x68] sm:$0xff]
    %v1071 = vld [vmem:[%s3 + $0x70] sm:$0xff]
    %v1072 = vld [vmem:[%s3 + $0x78] sm:$0xff]
    %v1073 = vld [vmem:[%s3 + $0x80] sm:$0xff]
    %v1074 = vld [vmem:[%s3 + $0x88] sm:$0xff]
    %v1075 = vld [vmem:[%s3 + $0x90] sm:$0xff]
    %v1076 = vld [vmem:[%s3 + $0x98] sm:$0xff]
    %v1077 = vld [vmem:[%s3 + $0xa0] sm:$0xff]
    %v1078 = vld [vmem:[%s3 + $0xa8] sm:$0xff]
    %v1079 = vld [vmem:[%s3 + $0xb0] sm:$0xff]
    %v1080 = vld [vmem:[%s3 + $0xb8] sm:$0xff]
    %v1081 = vld [vmem:[%s3 + $0xc0] sm:$0xff]
    %v1082 = vld [vmem:[%s3 + $0xc8] sm:$0xff]
    %v1083 = vld [vmem:[%s3 + $0xd0] sm:$0xff]
    %v1084 = vld [vmem:[%s3 + $0xd8] sm:$0xff]
    %v1085 = vld [vmem:[%s3 + $0xe0] sm:$0xff]
    %v1086 = vld [vmem:[%s3 + $0xe8] sm:$0xff]
    %v1087 = vld [vmem:[%s3 + $0xf0] sm:$0xff]
    %v1088 = vld [vmem:[%s3 + $0xf8] sm:$0xff]
    %v1089 = vld [vmem:[%s3 + $0x100] sm:$0xff]
    %v1090 = vld [vmem:[%s3 + $0x108] sm:$0xff]
    %v1091 = vld [vmem:[%s3 + $0x110] sm:$0xff]
    %v1092 = vld [vmem:[%s3 + $0x118] sm:$0xff]
    %v1093 = vld [vmem:[%s3 + $0x120] sm:$0xff]
    %v1094 = vld [vmem:[%s3 + $0x128] sm:$0xff]
    %v1095 = vld [vmem:[%s3 + $0x130] sm:$0xff]
    %v1096 = vld [vmem:[%s3 + $0x138] sm:$0xff]
    %v1097 = vld [vmem:[%s3 + $0x140] sm:$0xff]
    %v1098 = vld [vmem:[%s3 + $0x148] sm:$0xff]
    %v1099 = vld [vmem:[%s3 + $0x150] sm:$0xff]
    %v1100 = vld [vmem:[%s3 + $0x158] sm:$0xff]
    %v1101 = vld [vmem:[%s3 + $0x160] sm:$0xff]
    %v1102 = vld [vmem:[%s3 + $0x168] sm:$0xff]
    %v1103 = vld [vmem:[%s3 + $0x170] sm:$0xff]
    %v1104 = vld [vmem:[%s3 + $0x178] sm:$0xff]
    %v1105 = vld [vmem:[%s3 + $0x180] sm:$0xff]
    %v1106 = vld [vmem:[%s3 + $0x188] sm:$0xff]
    %v1107 = vld [vmem:[%s3 + $0x190] sm:$0xff]
    %v1108 = vld [vmem:[%s3 + $0x198] sm:$0xff]
    %v1109 = vld [vmem:[%s3 + $0x1a0] sm:$0xff]
    %v1110 = vld [vmem:[%s3 + $0x1a8] sm:$0xff]
    %v1111 = vld [vmem:[%s3 + $0x1b0] sm:$0xff]
    %v1112 = vld [vmem:[%s3 + $0x1b8] sm:$0xff]
    %v1113 = vld [vmem:[%s3 + $0x1c0] sm:$0xff]
    %v1114 = vld [vmem:[%s3 + $0x1c8] sm:$0xff]
    %v1115 = vld [vmem:[%s3 + $0x1d0] sm:$0xff]
    %v1116 = vld [vmem:[%s3 + $0x1d8] sm:$0xff]
    %v1117 = vld [vmem:[%s3 + $0x1e0] sm:$0xff]
    %v1118 = vld [vmem:[%s3 + $0x1e8] sm:$0xff]
    %v1119 = vld [vmem:[%s3 + $0x1f0] sm:$0xff]
    %v1120 = vld [vmem:[%s3 + $0x1f8] sm:$0xff]
    %v1121 = vld [vmem:[%s4] sm:$0x1]
    %v1123 = vlaneseq
    %v1124 = vshrl.u32 %v1123, 7
    %v1125 = vsub.s32 0, %v1124
    %v1126 = vrot.slane %v1121, %v1125
    %1128 = vmatprep.subr.mxu0 0.0
    %1129 = vmatpush1.msra.mxu0 %v1057
    %1130 = vmatprep.subr.mxu0 0.0
    %1131 = vmatpush1.msra.mxu0 %v1058
    %1132 = vmatprep.subr.mxu0 0.0
    %1133 = vmatpush1.msra.mxu0 %v1059
    %1134 = vmatprep.subr.mxu0 0.0
    %1135 = vmatpush1.msra.mxu0 %v1060
    %1136 = vmatprep.subr.mxu0 0.0
    %1137 = vmatpush1.msra.mxu0 %v1061
    %1138 = vmatprep.subr.mxu0 0.0
    %1139 = vmatpush1.msra.mxu0 %v1062
    %1140 = vmatprep.subr.mxu0 0.0
    %1141 = vmatpush1.msra.mxu0 %v1063
    %1142 = vmatprep.subr.mxu0 0.0
    %1143 = vmatpush1.msra.mxu0 %v1064
    %1144 = vmatprep.subr.mxu0 0.0
    %1145 = vmatpush1.msra.mxu0 %v1065
    %1146 = vmatprep.subr.mxu0 0.0
    %1147 = vmatpush1.msra.mxu0 %v1066
    %1148 = vmatprep.subr.mxu0 0.0
    %1149 = vmatpush1.msra.mxu0 %v1067
    %1150 = vmatprep.subr.mxu0 0.0
    %1151 = vmatpush1.msra.mxu0 %v1068
    %1152 = vmatprep.subr.mxu0 0.0
    %1153 = vmatpush1.msra.mxu0 %v1069
    %1154 = vmatprep.subr.mxu0 0.0
    %1155 = vmatpush1.msra.mxu0 %v1070
    %1156 = vmatprep.subr.mxu0 0.0
    %1157 = vmatpush1.msra.mxu0 %v1071
    %1158 = vmatprep.subr.mxu0 0.0
    %1159 = vmatpush1.msra.mxu0 %v1072
    %1160 = vmatprep.subr.mxu0 0.0
    %1161 = vmatpush1.msra.mxu0 %v1073
    %1162 = vmatprep.subr.mxu0 0.0
    %1163 = vmatpush1.msra.mxu0 %v1074
    %1164 = vmatprep.subr.mxu0 0.0
    %1165 = vmatpush1.msra.mxu0 %v1075
    %1166 = vmatprep.subr.mxu0 0.0
    %1167 = vmatpush1.msra.mxu0 %v1076
    %1168 = vmatprep.subr.mxu0 0.0
    %1169 = vmatpush1.msra.mxu0 %v1077
    %1170 = vmatprep.subr.mxu0 0.0
    %1171 = vmatpush1.msra.mxu0 %v1078
    %1172 = vmatprep.subr.mxu0 0.0
    %1173 = vmatpush1.msra.mxu0 %v1079
    %1174 = vmatprep.subr.mxu0 0.0
    %1175 = vmatpush1.msra.mxu0 %v1080
    %1176 = vmatprep.subr.mxu0 0.0
    %1177 = vmatpush1.msra.mxu0 %v1081
    %1178 = vmatprep.subr.mxu0 0.0
    %1179 = vmatpush1.msra.mxu0 %v1082
    %1180 = vmatprep.subr.mxu0 0.0
    %1181 = vmatpush1.msra.mxu0 %v1083
    %1182 = vmatprep.subr.mxu0 0.0
    %1183 = vmatpush1.msra.mxu0 %v1084
    %1184 = vmatprep.subr.mxu0 0.0
    %1185 = vmatpush1.msra.mxu0 %v1085
    %1186 = vmatprep.subr.mxu0 0.0
    %1187 = vmatpush1.msra.mxu0 %v1086
    %1188 = vmatprep.subr.mxu0 0.0
    %1189 = vmatpush1.msra.mxu0 %v1087
    %1190 = vmatprep.subr.mxu0 0.0
    %1191 = vmatpush1.msra.mxu0 %v1088
    %1192 = vmatprep.mubr.f32.mxu0 %v771
    %1193 = vmatmul.mubr.f32.gmra.mrb[0].mxu0 %v769
    %v1194 = vpop.f32.mrb[0].mxu0
    %v1195 = vadd.f32 %v1126, %v1194
    %v1196 = vpop.f32.mrb[0].mxu0
    %1197 = vdwg.mxu0
    %1198 = vmatprep.subr.mxu0 0.0
    %1199 = vmatpush1.msra.mxu0 %v1089
    %1200 = vmatprep.subr.mxu0 0.0
    %1201 = vmatpush1.msra.mxu0 %v1090
    %1202 = vmatprep.subr.mxu0 0.0
    %1203 = vmatpush1.msra.mxu0 %v1091
    %1204 = vmatprep.subr.mxu0 0.0
    %1205 = vmatpush1.msra.mxu0 %v1092
    %1206 = vmatprep.subr.mxu0 0.0
    %1207 = vmatpush1.msra.mxu0 %v1093
    %1208 = vmatprep.subr.mxu0 0.0
    %1209 = vmatpush1.msra.mxu0 %v1094
    %1210 = vmatprep.subr.mxu0 0.0
    %1211 = vmatpush1.msra.mxu0 %v1095
    %1212 = vmatprep.subr.mxu0 0.0
    %1213 = vmatpush1.msra.mxu0 %v1096
    %1214 = vmatprep.subr.mxu0 0.0
    %1215 = vmatpush1.msra.mxu0 %v1097
    %1216 = vmatprep.subr.mxu0 0.0
    %1217 = vmatpush1.msra.mxu0 %v1098
    %1218 = vmatprep.subr.mxu0 0.0
    %1219 = vmatpush1.msra.mxu0 %v1099
    %1220 = vmatprep.subr.mxu0 0.0
    %1221 = vmatpush1.msra.mxu0 %v1100
    %1222 = vmatprep.subr.mxu0 0.0
    %1223 = vmatpush1.msra.mxu0 %v1101
    %1224 = vmatprep.subr.mxu0 0.0
    %1225 = vmatpush1.msra.mxu0 %v1102
    %1226 = vmatprep.subr.mxu0 0.0
    %1227 = vmatpush1.msra.mxu0 %v1103
    %1228 = vmatprep.subr.mxu0 0.0
    %1229 = vmatpush1.msra.mxu0 %v1104
    %1230 = vmatprep.subr.mxu0 0.0
    %1231 = vmatpush1.msra.mxu0 %v1105
    %1232 = vmatprep.subr.mxu0 0.0
    %1233 = vmatpush1.msra.mxu0 %v1106
    %1234 = vmatprep.subr.mxu0 0.0
    %1235 = vmatpush1.msra.mxu0 %v1107
    %1236 = vmatprep.subr.mxu0 0.0
    %1237 = vmatpush1.msra.mxu0 %v1108
    %1238 = vmatprep.subr.mxu0 0.0
    %1239 = vmatpush1.msra.mxu0 %v1109
    %1240 = vmatprep.subr.mxu0 0.0
    %1241 = vmatpush1.msra.mxu0 %v1110
    %1242 = vmatprep.subr.mxu0 0.0
    %1243 = vmatpush1.msra.mxu0 %v1111
    %1244 = vmatprep.subr.mxu0 0.0
    %1245 = vmatpush1.msra.mxu0 %v1112
    %1246 = vmatprep.subr.mxu0 0.0
    %1247 = vmatpush1.msra.mxu0 %v1113
    %1248 = vmatprep.subr.mxu0 0.0
    %1249 = vmatpush1.msra.mxu0 %v1114
    %1250 = vmatprep.subr.mxu0 0.0
    %1251 = vmatpush1.msra.mxu0 %v1115
    %1252 = vmatprep.subr.mxu0 0.0
    %1253 = vmatpush1.msra.mxu0 %v1116
    %1254 = vmatprep.subr.mxu0 0.0
    %1255 = vmatpush1.msra.mxu0 %v1117
    %1256 = vmatprep.subr.mxu0 0.0
    %1257 = vmatpush1.msra.mxu0 %v1118
    %1258 = vmatprep.subr.mxu0 0.0
    %1259 = vmatpush1.msra.mxu0 %v1119
    %1260 = vmatprep.subr.mxu0 0.0
    %1261 = vmatpush1.msra.mxu0 %v1120
    %1262 = vmatprep.mubr.f32.mxu0 %v1055
    %1263 = vmatmul.mubr.f32.gmra.mrb[0].mxu0 %v1053
    %v1264 = vpop.f32.mrb[0].mxu0
    %v1265 = vadd.f32 %v1195, %v1264
    %v1266 = vpop.f32.mrb[0].mxu0
    %1267 = vdwg.mxu0
    %1268 = vst [vmem:[#allocation8] sm:$0xf] %v1265
    // Predicated region
    $region34: #{no_act_net_forward.1} parent=1 // pred_check
      _
    $region35: #{no_act_net_forward.1} parent=1 // pred_check_branch
      %1270 = sbr.rel (0) target = $region37
    $region36: #{no_act_net_forward.1} parent=1 // pred_region
      %s1272 = ssub.s32 64, 64
      %1273 = vsyncadd [#allocation4], %s1272
      %s1275 = sshll.u32 [#allocation8], 4
      %s1276 = int_to_ptr.vmem [resolvable:$true] %s1275
      %1278 = dma.vmem_to_hbm [thread:$0]  %s1276, 64, %s5, [#allocation4]
    $region37: #{no_act_net_forward.1} parent=1 // pred_fallthru
      _
    // Predicated region
    $region38: #{no_act_net_forward.1} parent=1 // pred_check
      _
    $region39: #{no_act_net_forward.1} parent=1 // pred_check_branch
      %1280 = sbr.rel (0) target = $region41
    $region40: #{no_act_net_forward.1} parent=1 // pred_region
      %1281 = dma.done [#allocation4], 64
    $region41: #{no_act_net_forward.1} parent=1 // pred_fallthru
      _
    %1282 = vsyncpa [#allocation3], 1
    %1283 = vsyncpa [#allocation6], 1
    %1284 = vsyncpa [#allocation4], 1

</llo_original>
